<compile_context>
chip_gen: v5e
topology: v5e:2x2
jax: 0.10.0
libtpu: 0.0.40
codegen_flags: <defaults>
</compile_context>

<pallas_src>
import jax
import jax.numpy as jnp
from jax.experimental import pallas as pl
from jax.experimental.pallas import tpu as pltpu

LANES = 128

DX = 16          # input dimension
DH = 8           # latent dimension
SUBSAMPLE = 4
BATCH = 128      # >=128 rows keeps the MXU fed and amortizes launch overhead
CONFIG = {
    "enc": [32, 32],
    "mu_enc": [32],
    "var_enc": [32],
    "dec": [32, 32],
    "enc_ac": "relu",
    "dec_ac": "relu",
    "final_ac": "sigmoid",
}


def _apply_act(h, act):
    if act == "relu":
        return jnp.maximum(h, 0.0)
    if act == "sigmoid":
        return jax.nn.sigmoid(h)
    if act == "none":
        return h
    raise ValueError(act)


# ---------------------------------------------------------------------------
# Parameter init (deterministic; mimics PyTorch nn.Linear default U(-k, k))
# ---------------------------------------------------------------------------
def init_linear(key, d_in, d_out):
    kw, kb = jax.random.split(key)
    bound = 1.0 / (d_in ** 0.5)
    W = jax.random.uniform(kw, (d_in, d_out), jnp.float32, -bound, bound)
    b = jax.random.uniform(kb, (1, d_out), jnp.float32, -bound, bound)
    return W, b


def init_stack(key, d_in, dims):
    wbs, prev = [], d_in
    for dn in dims:
        key, sub = jax.random.split(key)
        wbs.append(init_linear(sub, prev, dn))
        prev = dn
    return wbs, prev, key


def init_vnet_params(key, dx, dh, config):
    enc_wb, prev, key = init_stack(key, dx, config["enc"])
    mu_wb, prev_mu, key = init_stack(key, prev, config["mu_enc"])
    key, sub = jax.random.split(key)
    mu_wb.append(init_linear(sub, prev_mu, dh))
    var_wb, prev_var, key = init_stack(key, prev, config["var_enc"])
    key, sub = jax.random.split(key)
    var_wb.append(init_linear(sub, prev_var, dh))
    dec_wb, prev_dec, key = init_stack(key, dh, config["dec"])
    key, sub = jax.random.split(key)
    dec_wb.append(init_linear(sub, prev_dec, dx))
    return enc_wb, mu_wb, var_wb, dec_wb


# ---------------------------------------------------------------------------
# Host-side weight packing: one (L*128, 128) weight slab + one (L, 128) bias slab
# ---------------------------------------------------------------------------
def _block_diag(Wa, Wb):
    za = jnp.zeros((Wa.shape[0], Wb.shape[1]), Wa.dtype)
    zb = jnp.zeros((Wb.shape[0], Wa.shape[1]), Wb.dtype)
    return jnp.concatenate(
        [jnp.concatenate([Wa, za], axis=1), jnp.concatenate([zb, Wb], axis=1)], axis=0)


def pack_vnet_params(params, config, dh, w_dtype=jnp.bfloat16):
    """Every layer padded to a uniform (128, 128) weight block so all matmuls are
    (M,128)@(128,128).  mu/var head hidden layers fused (col-concat then
    block-diag); the two final head projections fused into ONE layer producing
    mu at lanes [0,dh) and log_var at lanes [dh,2dh).  The first decoder layer
    has its latent rows duplicated so the kernel's split z layout
    [mu | eps*std | 0...] contracts to (mu + eps*std) @ W.
    NOTE: all pads MUST be exact zeros — zero-padded W cols + biases keep junk
    lanes at 0 (so exp() on them is 1 and never overflows) and zero-padded W
    rows guarantee junk lanes never leak into any matmul."""
    enc_wb, mu_wb, var_wb, dec_wb = params
    assert len(mu_wb) == len(var_wb), "head fusion requires equal-depth mu/var stacks"
    assert 2 * dh <= LANES

    w_blocks, b_rows, idx = [], [], [0]
    trunk, dec = [], []

    def push(W, b, act, bucket):
        assert W.shape[0] <= LANES and W.shape[1] <= LANES
        w_blocks.append(jnp.pad(W, ((0, LANES - W.shape[0]), (0, LANES - W.shape[1]))))
        b_rows.append(jnp.pad(jnp.reshape(b, (-1,)), (0, LANES - b.shape[-1])))
        i = idx[0]
        idx[0] += 1
        if bucket is not None:
            bucket.append((i, act))
        return i

    enc_ac, dec_ac, final_ac = config["enc_ac"], config["dec_ac"], config["final_ac"]

    # encoder trunk
    for W, b in enc_wb:
        push(W, b, enc_ac, trunk)

    # fused mu/var hidden layers
    mu_hidden, (Wmf, bmf) = mu_wb[:-1], mu_wb[-1]
    var_hidden, (Wvf, bvf) = var_wb[:-1], var_wb[-1]
    for j, ((Wm, bm), (Wv, bv)) in enumerate(zip(mu_hidden, var_hidden)):
        Wf = jnp.concatenate([Wm, Wv], axis=1) if j == 0 else _block_diag(Wm, Wv)
        push(Wf, jnp.concatenate([bm, bv], axis=1), enc_ac, trunk)

    # fused final head: out lanes [0,dh)=mu, [dh,2dh)=log_var
    Wh = _block_diag(Wmf, Wvf) if mu_hidden else jnp.concatenate([Wmf, Wvf], axis=1)
    head_idx = push(Wh, jnp.concatenate([bmf, bvf], axis=1), "none", None)

    # decoder; first layer reads split z [mu | eps*std] via duplicated rows
    dec_acts = [dec_ac] * (len(dec_wb) - 1) + [final_ac]
    for i, ((W, b), act) in enumerate(zip(dec_wb, dec_acts)):
        if i == 0:
            W = jnp.concatenate([W, W], axis=0)
        push(W, b, act, dec)

    w_slab = jnp.concatenate(w_blocks, axis=0).astype(w_dtype)   # (L*128, 128)
    b_arr = jnp.stack(b_rows, axis=0).astype(jnp.float32)        # (L, 128)
    b_slab = jnp.pad(b_arr, ((0, (-b_arr.shape[0]) % 8), (0, 0)))
    meta = {"trunk": trunk, "head": head_idx, "dec": dec}
    return w_slab, b_slab, meta


# ---------------------------------------------------------------------------
# Fused kernel: encode -> fused mu|log_var head -> reparameterize -> decode
# ---------------------------------------------------------------------------
def make_vnet_kernel(meta, dh, b_chunk, subsample, w_dtype):
    trunk, head_idx, dec = meta["trunk"], meta["head"], meta["dec"]
    SB = subsample * b_chunk

    def dense(w_ref, b_ref, h, layer_idx, act):
        W = w_ref[pl.ds(layer_idx * LANES, LANES), :]     # (128,128), tile aligned
        b = b_ref[pl.ds(layer_idx, 1), :]                 # (1,128) f32
        y = jnp.dot(h.astype(w_dtype), W, preferred_element_type=jnp.float32) + b
        return _apply_act(y, act)

    def kernel(x_ref, eps_ref, w_ref, b_ref, head_ref, xh_ref):
        # ---- encoder + fused mu/var hidden layers (uniform K=128 matmuls) ----
        h = x_ref[...]                                    # (Bc, 128), zero padded
        for li, act in trunk:
            h = dense(w_ref, b_ref, h, li, act)
        head = dense(w_ref, b_ref, h, head_idx, "none")   # mu @ [0,dh), lv @ [dh,2dh)
        head_ref[...] = head

        # ---- reparameterize on the split layout [mu | eps*std | 0] ----
        std = jnp.exp(0.5 * head)                         # only lanes [dh,2dh) used
        rep = lambda a: jnp.broadcast_to(                 # s-major, tile-aligned merge
            a, (subsample, b_chunk, LANES)).reshape(SB, LANES)
        eps = eps_ref[...]                                # eps values at lanes [dh,2dh)
        lane = jax.lax.broadcasted_iota(jnp.int32, (1, LANES), 1)
        z = jnp.where(lane < dh, rep(head), eps * rep(std))

        # ---- decoder (first layer has duplicated latent rows -> mu + eps*std) ----
        g = z
        for li, act in dec:
            g = dense(w_ref, b_ref, g, li, act)
        xh_ref[...] = g                                   # lane-dense (S*Bc, 128)

    return kernel


# ---------------------------------------------------------------------------
# Wrapper
# ---------------------------------------------------------------------------
def build_vnet_forward(params, dx, dh, subsample, config, batch,
                       w_dtype=jnp.bfloat16):
    """Returns a jitted forward(x, key) -> (x_hat, mu, log_var, eps)."""
    assert batch % 8 == 0, "batch must be a multiple of 8 for clean sublane tiling"
    assert dx <= LANES and 2 * dh <= LANES
    w_slab, b_slab, meta = pack_vnet_params(params, config, dh, w_dtype)

    # Row-chunk grid: >1 chunk only pays off on v7x (2 TensorCores); weights/biases
    # use constant index_maps so they stay VMEM-resident across grid steps.
    b_chunk = 64 if (batch % 64 == 0 and batch // 64 >= 2) else batch
    n_chunks = batch // b_chunk
    S = subsample
    SBc = S * b_chunk

    kernel = make_vnet_kernel(meta, dh, b_chunk, S, w_dtype)
    wr, br = w_slab.shape[0], b_slab.shape[0]

    call = pl.pallas_call(
        kernel,
        grid=(n_chunks,),
        out_shape=(
            jax.ShapeDtypeStruct((batch, LANES), jnp.float32),          # mu | log_var
            jax.ShapeDtypeStruct((n_chunks * SBc, LANES), jnp.float32), # x_hat slab
        ),
        in_specs=[
            pl.BlockSpec((b_chunk, LANES), lambda i: (i, 0)),   # x (lane padded)
            pl.BlockSpec((SBc, LANES), lambda i: (i, 0)),       # eps (lanes [dh,2dh))
            pl.BlockSpec((wr, LANES), lambda i: (0, 0)),        # weight slab, resident
            pl.BlockSpec((br, LANES), lambda i: (0, 0)),        # bias slab, resident
        ],
        out_specs=(
            pl.BlockSpec((b_chunk, LANES), lambda i: (i, 0)),
            pl.BlockSpec((SBc, LANES), lambda i: (i, 0)),
        ),
        compiler_params=pltpu.CompilerParams(
            dimension_semantics=("parallel",)),
    )

    @jax.jit
    def forward(x, key):
        # TODO(synk): torch.randn's exact bit-stream cannot be reproduced; eps is the
        # same N(0,1) distribution drawn with JAX's RNG (deterministic per key).
        eps = jax.random.normal(key, (batch, S, dh), jnp.float32)
        # kernel layout: chunk-major, s-major within chunk, values at lanes [dh,2dh)
        eps_k = (eps.reshape(n_chunks, b_chunk, S, dh)
                    .transpose(0, 2, 1, 3)
                    .reshape(n_chunks * SBc, dh))
        eps_k = jnp.pad(eps_k, ((0, 0), (dh, LANES - 2 * dh)))
        x_p = jnp.pad(x, ((0, 0), (0, LANES - dx)))

        head, xh = call(x_p, eps_k, w_slab, b_slab)
        mu = head[:, :dh]
        log_var = head[:, dh:2 * dh]
        x_hat = (xh[:, :dx]
                 .reshape(n_chunks, S, b_chunk, dx)
                 .transpose(0, 2, 1, 3)
                 .reshape(batch, S, dx))
        return x_hat, mu, log_var, eps

    return forward


# ---------------------------------------------------------------------------
# Pure-JAX reference (original, unpacked f32 weights) for correctness checking
# ---------------------------------------------------------------------------
def ref_forward(x, params, eps, config):
    """eps: (B, S, dh) — the exact eps values the kernel consumed."""
    enc_wb, mu_wb, var_wb, dec_wb = params

    def mlp(h, wbs, acts):
        for (W, b), act in zip(wbs, acts):
            h = _apply_act(h @ W + b, act)
        return h

    enc_acts = [config["enc_ac"]] * len(enc_wb)
    mu_acts = [config["enc_ac"]] * (len(mu_wb) - 1) + ["none"]
    var_acts = [config["enc_ac"]] * (len(var_wb) - 1) + ["none"]
    dec_acts = [config["dec_ac"]] * (len(dec_wb) - 1) + [config["final_ac"]]

    h = mlp(x, enc_wb, enc_acts)
    mu = mlp(h, mu_wb, mu_acts)
    log_var = mlp(h, var_wb, var_acts)

    B, S, dh = eps.shape
    std = jnp.exp(0.5 * log_var)
    z = eps * std[:, None, :] + mu[:, None, :]          # (B, S, dh)
    xh = mlp(z.reshape(B * S, dh), dec_wb, dec_acts)    # (B*S, dx)
    x_hat = xh.reshape(B, S, -1)
    return x_hat, mu, log_var


if __name__ == "__main__":
    key = jax.random.PRNGKey(0)
    k_param, k_x, k_eps = jax.random.split(key, 3)

    params = init_vnet_params(k_param, DX, DH, CONFIG)
    x = jax.random.normal(k_x, (BATCH, DX), jnp.float32)

    forward = build_vnet_forward(params, DX, DH, SUBSAMPLE, CONFIG, BATCH)
    x_hat, mu, log_var, eps = forward(x, k_eps)
    jax.block_until_ready((x_hat, mu, log_var, eps))

    assert x_hat.shape == (BATCH, SUBSAMPLE, DX)
    assert mu.shape == (BATCH, DH) and log_var.shape == (BATCH, DH)

    # verify against the pure-JAX f32 reference using the eps the kernel consumed
    # (kernel runs bf16 weights/activations with f32 accumulation -> ~1e-2 tolerance)
    xh_ref, mu_ref, lv_ref = ref_forward(x, params, eps, CONFIG)
    assert jnp.allclose(mu, mu_ref, atol=3e-2, rtol=3e-2)
    assert jnp.allclose(log_var, lv_ref, atol=3e-2, rtol=3e-2)
    assert jnp.allclose(x_hat, xh_ref, atol=3e-2, rtol=3e-2)

    print("KERNEL_OK")
</pallas_src>

<mosaic_0001>
module attributes {stable_mosaic.version = 11 : i64} {
  func.func @kernel(%arg0: i32, %arg1: memref<64x128xf32, #tpu.memory_space<vmem>>, %arg2: memref<256x128xf32, #tpu.memory_space<vmem>>, %arg3: memref<896x128xbf16, #tpu.memory_space<vmem>>, %arg4: memref<8x128xf32, #tpu.memory_space<vmem>>, %arg5: memref<64x128xf32, #tpu.memory_space<vmem>>, %arg6: memref<256x128xf32, #tpu.memory_space<vmem>>) attributes {dimension_semantics = [#tpu.dimension_semantics<parallel>], iteration_bounds = array<i64: 2>, scalar_prefetch = 0 : i64, scratch_operands = 0 : i64, tpu.core_type = #tpu.core_type<tc>, window_params = [{transform_indices = @transform_0, window_bounds = array<i64: 64, 128>}, {transform_indices = @transform_1, window_bounds = array<i64: 256, 128>}, {pipeline_mode = #tpu.pipeline_mode<synchronous>, transform_indices = @transform_2, window_bounds = array<i64: 896, 128>}, {pipeline_mode = #tpu.pipeline_mode<synchronous>, transform_indices = @transform_3, window_bounds = array<i64: 8, 128>}, {transform_indices = @transform_4, window_bounds = array<i64: 64, 128>}, {transform_indices = @transform_5, window_bounds = array<i64: 256, 128>}]} {
    %c0 = arith.constant 0 : index
    %c0_0 = arith.constant 0 : index
    %0 = vector.load %arg1[%c0, %c0_0] : memref<64x128xf32, #tpu.memory_space<vmem>>, vector<64x128xf32>
    %c0_1 = arith.constant 0 : index
    %c0_2 = arith.constant 0 : index
    %1 = vector.load %arg3[%c0_1, %c0_2] : memref<896x128xbf16, #tpu.memory_space<vmem>>, vector<128x128xbf16>
    %c0_3 = arith.constant 0 : index
    %c0_4 = arith.constant 0 : index
    %2 = vector.load %arg4[%c0_3, %c0_4] : memref<8x128xf32, #tpu.memory_space<vmem>>, vector<1x128xf32>
    %3 = arith.truncf %0 : vector<64x128xf32> to vector<64x128xbf16>
    %cst = arith.constant dense<0.000000e+00> : vector<64x128xf32>
    %4 = tpu.matmul %3, %1, %cst {dimension_numbers = #tpu.dot_dimension_numbers<[1], [0], [0], [1], [0, 0, 1, 1], [], []>} : vector<64x128xbf16>, vector<128x128xbf16>, vector<64x128xf32> -> vector<64x128xf32>
    %5 = vector.broadcast %2 : vector<1x128xf32> to vector<64x128xf32>
    %6 = arith.addf %4, %5 : vector<64x128xf32>
    %cst_5 = arith.constant 0.000000e+00 : f32
    %7 = vector.broadcast %cst_5 : f32 to vector<64x128xf32>
    %8 = arith.maximumf %6, %7 : vector<64x128xf32>
    %c128 = arith.constant 128 : index
    %c0_6 = arith.constant 0 : index
    %9 = vector.load %arg3[%c128, %c0_6] : memref<896x128xbf16, #tpu.memory_space<vmem>>, vector<128x128xbf16>
    %c1 = arith.constant 1 : index
    %c0_7 = arith.constant 0 : index
    %10 = vector.load %arg4[%c1, %c0_7] : memref<8x128xf32, #tpu.memory_space<vmem>>, vector<1x128xf32>
    %11 = arith.truncf %8 : vector<64x128xf32> to vector<64x128xbf16>
    %cst_8 = arith.constant dense<0.000000e+00> : vector<64x128xf32>
    %12 = tpu.matmul %11, %9, %cst_8 {dimension_numbers = #tpu.dot_dimension_numbers<[1], [0], [0], [1], [0, 0, 1, 1], [], []>} : vector<64x128xbf16>, vector<128x128xbf16>, vector<64x128xf32> -> vector<64x128xf32>
    %13 = vector.broadcast %10 : vector<1x128xf32> to vector<64x128xf32>
    %14 = arith.addf %12, %13 : vector<64x128xf32>
    %cst_9 = arith.constant 0.000000e+00 : f32
    %15 = vector.broadcast %cst_9 : f32 to vector<64x128xf32>
    %16 = arith.maximumf %14, %15 : vector<64x128xf32>
    %c256 = arith.constant 256 : index
    %c0_10 = arith.constant 0 : index
    %17 = vector.load %arg3[%c256, %c0_10] : memref<896x128xbf16, #tpu.memory_space<vmem>>, vector<128x128xbf16>
    %c2 = arith.constant 2 : index
    %c0_11 = arith.constant 0 : index
    %18 = vector.load %arg4[%c2, %c0_11] : memref<8x128xf32, #tpu.memory_space<vmem>>, vector<1x128xf32>
    %19 = arith.truncf %16 : vector<64x128xf32> to vector<64x128xbf16>
    %cst_12 = arith.constant dense<0.000000e+00> : vector<64x128xf32>
    %20 = tpu.matmul %19, %17, %cst_12 {dimension_numbers = #tpu.dot_dimension_numbers<[1], [0], [0], [1], [0, 0, 1, 1], [], []>} : vector<64x128xbf16>, vector<128x128xbf16>, vector<64x128xf32> -> vector<64x128xf32>
    %21 = vector.broadcast %18 : vector<1x128xf32> to vector<64x128xf32>
    %22 = arith.addf %20, %21 : vector<64x128xf32>
    %cst_13 = arith.constant 0.000000e+00 : f32
    %23 = vector.broadcast %cst_13 : f32 to vector<64x128xf32>
    %24 = arith.maximumf %22, %23 : vector<64x128xf32>
    %c384 = arith.constant 384 : index
    %c0_14 = arith.constant 0 : index
    %25 = vector.load %arg3[%c384, %c0_14] : memref<896x128xbf16, #tpu.memory_space<vmem>>, vector<128x128xbf16>
    %c3 = arith.constant 3 : index
    %c0_15 = arith.constant 0 : index
    %26 = vector.load %arg4[%c3, %c0_15] : memref<8x128xf32, #tpu.memory_space<vmem>>, vector<1x128xf32>
    %27 = arith.truncf %24 : vector<64x128xf32> to vector<64x128xbf16>
    %cst_16 = arith.constant dense<0.000000e+00> : vector<64x128xf32>
    %28 = tpu.matmul %27, %25, %cst_16 {dimension_numbers = #tpu.dot_dimension_numbers<[1], [0], [0], [1], [0, 0, 1, 1], [], []>} : vector<64x128xbf16>, vector<128x128xbf16>, vector<64x128xf32> -> vector<64x128xf32>
    %29 = vector.broadcast %26 : vector<1x128xf32> to vector<64x128xf32>
    %30 = arith.addf %28, %29 : vector<64x128xf32>
    %c0_17 = arith.constant 0 : index
    %c0_18 = arith.constant 0 : index
    %31 = vector.load %arg5[%c0_17, %c0_18] : memref<64x128xf32, #tpu.memory_space<vmem>>, vector<64x128xf32>
    tpu.vector_store %arg5[%c0_17, %c0_18], %30 {strides = array<i32>} : memref<64x128xf32, #tpu.memory_space<vmem>>, vector<64x128xf32>,
    %cst_19 = arith.constant 5.000000e-01 : f32
    %32 = vector.broadcast %cst_19 : f32 to vector<64x128xf32>
    %33 = arith.mulf %32, %30 : vector<64x128xf32>
    %34 = math.exp %33 : vector<64x128xf32>
    %c0_20 = arith.constant 0 : index
    %c0_21 = arith.constant 0 : index
    %35 = vector.load %arg2[%c0_20, %c0_21] : memref<256x128xf32, #tpu.memory_space<vmem>>, vector<256x128xf32>
    %36 = tpu.iota {dimensions = array<i32: 1>} : vector<1x128xi32>
    %c8_i32 = arith.constant 8 : i32
    %37 = vector.broadcast %c8_i32 : i32 to vector<1x128xi32>
    %38 = arith.cmpi slt, %36, %37 : vector<1x128xi32>
    %39 = vector.shape_cast %30 : vector<64x128xf32> to vector<1x64x128xf32>
    %40 = vector.broadcast %39 : vector<1x64x128xf32> to vector<4x64x128xf32>
    %41 = vector.shape_cast %40 : vector<4x64x128xf32> to vector<256x128xf32>
    %42 = vector.shape_cast %34 : vector<64x128xf32> to vector<1x64x128xf32>
    %43 = vector.broadcast %42 : vector<1x64x128xf32> to vector<4x64x128xf32>
    %44 = vector.shape_cast %43 : vector<4x64x128xf32> to vector<256x128xf32>
    %45 = arith.mulf %35, %44 : vector<256x128xf32>
    %46 = vector.shape_cast %38 : vector<1x128xi1> to vector<1x128xi1>
    %47 = vector.broadcast %46 : vector<1x128xi1> to vector<256x128xi1>
    %48 = arith.select %47, %41, %45 : vector<256x128xi1>, vector<256x128xf32>
    %c512 = arith.constant 512 : index
    %c0_22 = arith.constant 0 : index
    %49 = vector.load %arg3[%c512, %c0_22] : memref<896x128xbf16, #tpu.memory_space<vmem>>, vector<128x128xbf16>
    %c4 = arith.constant 4 : index
    %c0_23 = arith.constant 0 : index
    %50 = vector.load %arg4[%c4, %c0_23] : memref<8x128xf32, #tpu.memory_space<vmem>>, vector<1x128xf32>
    %51 = arith.truncf %48 : vector<256x128xf32> to vector<256x128xbf16>
    %cst_24 = arith.constant dense<0.000000e+00> : vector<256x128xf32>
    %52 = tpu.matmul %51, %49, %cst_24 {dimension_numbers = #tpu.dot_dimension_numbers<[1], [0], [0], [1], [0, 0, 1, 1], [], []>} : vector<256x128xbf16>, vector<128x128xbf16>, vector<256x128xf32> -> vector<256x128xf32>
    %53 = vector.broadcast %50 : vector<1x128xf32> to vector<256x128xf32>
    %54 = arith.addf %52, %53 : vector<256x128xf32>
    %cst_25 = arith.constant 0.000000e+00 : f32
    %55 = vector.broadcast %cst_25 : f32 to vector<256x128xf32>
    %56 = arith.maximumf %54, %55 : vector<256x128xf32>
    %c640 = arith.constant 640 : index
    %c0_26 = arith.constant 0 : index
    %57 = vector.load %arg3[%c640, %c0_26] : memref<896x128xbf16, #tpu.memory_space<vmem>>, vector<128x128xbf16>
    %c5 = arith.constant 5 : index
    %c0_27 = arith.constant 0 : index
    %58 = vector.load %arg4[%c5, %c0_27] : memref<8x128xf32, #tpu.memory_space<vmem>>, vector<1x128xf32>
    %59 = arith.truncf %56 : vector<256x128xf32> to vector<256x128xbf16>
    %cst_28 = arith.constant dense<0.000000e+00> : vector<256x128xf32>
    %60 = tpu.matmul %59, %57, %cst_28 {dimension_numbers = #tpu.dot_dimension_numbers<[1], [0], [0], [1], [0, 0, 1, 1], [], []>} : vector<256x128xbf16>, vector<128x128xbf16>, vector<256x128xf32> -> vector<256x128xf32>
    %61 = vector.broadcast %58 : vector<1x128xf32> to vector<256x128xf32>
    %62 = arith.addf %60, %61 : vector<256x128xf32>
    %cst_29 = arith.constant 0.000000e+00 : f32
    %63 = vector.broadcast %cst_29 : f32 to vector<256x128xf32>
    %64 = arith.maximumf %62, %63 : vector<256x128xf32>
    %c768 = arith.constant 768 : index
    %c0_30 = arith.constant 0 : index
    %65 = vector.load %arg3[%c768, %c0_30] : memref<896x128xbf16, #tpu.memory_space<vmem>>, vector<128x128xbf16>
    %c6 = arith.constant 6 : index
    %c0_31 = arith.constant 0 : index
    %66 = vector.load %arg4[%c6, %c0_31] : memref<8x128xf32, #tpu.memory_space<vmem>>, vector<1x128xf32>
    %67 = arith.truncf %64 : vector<256x128xf32> to vector<256x128xbf16>
    %cst_32 = arith.constant dense<0.000000e+00> : vector<256x128xf32>
    %68 = tpu.matmul %67, %65, %cst_32 {dimension_numbers = #tpu.dot_dimension_numbers<[1], [0], [0], [1], [0, 0, 1, 1], [], []>} : vector<256x128xbf16>, vector<128x128xbf16>, vector<256x128xf32> -> vector<256x128xf32>
    %69 = vector.broadcast %66 : vector<1x128xf32> to vector<256x128xf32>
    %70 = arith.addf %68, %69 : vector<256x128xf32>
    %71 = arith.negf %70 : vector<256x128xf32>
    %72 = math.exp %71 : vector<256x128xf32>
    %cst_33 = arith.constant 1.000000e+00 : f32
    %73 = vector.broadcast %cst_33 : f32 to vector<256x128xf32>
    %74 = arith.addf %73, %72 : vector<256x128xf32>
    %75 = arith.divf %73, %74 : vector<256x128xf32>
    %c0_34 = arith.constant 0 : index
    %c0_35 = arith.constant 0 : index
    %76 = vector.load %arg6[%c0_34, %c0_35] : memref<256x128xf32, #tpu.memory_space<vmem>>, vector<256x128xf32>
    tpu.vector_store %arg6[%c0_34, %c0_35], %75 {strides = array<i32>} : memref<256x128xf32, #tpu.memory_space<vmem>>, vector<256x128xf32>,
    return
  }
  func.func @transform_0(%arg0: i32) -> (i32, i32) {
    %c0_i32 = arith.constant 0 : i32
    %c0_i32_0 = arith.constant 0 : i32
    return %arg0, %c0_i32 : i32, i32
  }
  func.func @transform_1(%arg0: i32) -> (i32, i32) {
    %c0_i32 = arith.constant 0 : i32
    %c0_i32_0 = arith.constant 0 : i32
    return %arg0, %c0_i32 : i32, i32
  }
  func.func @transform_2(%arg0: i32) -> (i32, i32) {
    %c0_i32 = arith.constant 0 : i32
    %c0_i32_0 = arith.constant 0 : i32
    %c0_i32_1 = arith.constant 0 : i32
    return %c0_i32, %c0_i32_0 : i32, i32
  }
  func.func @transform_3(%arg0: i32) -> (i32, i32) {
    %c0_i32 = arith.constant 0 : i32
    %c0_i32_0 = arith.constant 0 : i32
    %c0_i32_1 = arith.constant 0 : i32
    return %c0_i32, %c0_i32_0 : i32, i32
  }
  func.func @transform_4(%arg0: i32) -> (i32, i32) {
    %c0_i32 = arith.constant 0 : i32
    %c0_i32_0 = arith.constant 0 : i32
    return %arg0, %c0_i32 : i32, i32
  }
  func.func @transform_5(%arg0: i32) -> (i32, i32) {
    %c0_i32 = arith.constant 0 : i32
    %c0_i32_0 = arith.constant 0 : i32
    return %arg0, %c0_i32 : i32, i32
  }
}

</mosaic_0001>

<llo_original>
// kernel: forward.1
$region0: #{forward.1}
  #allocation0 [shape = 'u32[]', space=smem, size = 0x4, offset = 0x4, fixed_abs, tag = 'smem constant byte address 0x4 - core index']
  #allocation1 [shape = 'u32[72,128]{1,0:T(1,128)}', space=vmem, size = 0x9000, scoped, tag = 'internal scratch']
  %s0 = inlined_call_operand.vmem [shape: f32[128,128], index: 0, kind: input, shape index: {}]
  %s1 = inlined_call_operand.vmem [shape: f32[512,128], index: 1, kind: input, shape index: {}]
  %s2 = inlined_call_operand.vmem [shape: bf16[896,128], index: 2, kind: input, shape index: {}]
  %s3 = inlined_call_operand.vmem [shape: f32[8,128], index: 3, kind: input, shape index: {}]
  %s4 = inlined_call_operand.vmem [shape: f32[128,128], index: 4, kind: output, shape index: {0}]
  %s5 = inlined_call_operand.vmem [shape: f32[512,128], index: 5, kind: output, shape index: {1}]
  %6 = xla_tuple %s4, %s5
  %s7 = sld [smem:[#allocation0]]
  $region57: #{forward.1} parent=0
    _
  %s9 = ssub.s32 1, %s7
  %s10 = scalar_select 0, %s9, %s7
  loop: start=0, step=1, limit=4
  $region2: #{forward.1} parent=0 // loop_pre_header
    _
  $region3: #{forward.1} parent=0 // loop_header
    %s12 = sphi 0, %s16
    %p13 = scmp.ge.s32.totalorder %s12, 4
    %s22 = sphi 0, %s24
    %s25 = sphi 0, %s22
    %s26 = sphi 0, %s25
    %s42 = sphi 0, %s26
    %s48 = sphi 0, %s50
    %s51 = sphi 0, %s48
    %s52 = sphi 0, %s51
    %s68 = sphi 0, %s52
    %s72 = sphi 0, %s72
    %s74 = sphi 0, %s72
    %s75 = sphi 0, %s74
    %s89 = sphi 0, %s75
    %s93 = sphi 0, %s93
    %s95 = sphi 0, %s93
    %s96 = sphi 0, %s95
    %s110 = sphi 0, %s96
    %s116 = sphi 0, %s118
    %s119 = sphi 0, %s116
    %s120 = sphi 0, %s119
    %s136 = sphi 0, %s120
    %s142 = sphi 0, %s144
    %s145 = sphi 0, %s142
    %s146 = sphi 0, %s145
    %s162 = sphi 0, %s146
  $region4: #{forward.1} parent=0 // loop_header_branch
    %15 = sbr.rel (%p13) target = $region8
  $region5: #{forward.1} parent=0 // loop_body
    %s17 = ssub.s32 %s12, 1
    %s18 = ssub.s32 %s12, 2
    %s19 = sadd.s32 %s12, 1
    %s20 = ssub.s32 %s12, %s19
    %p21 = scmp.eq.s32.totalorder %s20, 0
    %s23 = sadd.s32 %s22, 1
    %s24 = scalar_select %p21, %s22, %s23
    %p27 = pneg %p21
    %p28 = scmp.eq.s32.totalorder %s12, 1
    %p29 = por %p27, %p28
    %p30 = scmp.ne.s32.totalorder %s22, %s25
    %p31 = scmp.eq.s32.totalorder %s12, 0
    %p32 = por %p30, %p31
    %p33 = scmp.ne.s32.totalorder %s22, %s25
    %p34 = scmp.eq.s32.totalorder %s17, 1
    %p35 = por %p33, %p34
    %p36 = scmp.ne.s32.totalorder %s25, %s26
    %p37 = scmp.eq.s32.totalorder %s17, 0
    %p38 = por %p36, %p37
    %p39 = scmp.ne.s32.totalorder %s25, %s26
    %p40 = scmp.eq.s32.totalorder %s18, 1
    %p41 = por %p39, %p40
    %p43 = scmp.ne.s32.totalorder %s26, %s42
    %p44 = scmp.eq.s32.totalorder %s18, 0
    %p45 = por %p43, %p44
    %s46 = ssub.s32 %s12, %s19
    %p47 = scmp.eq.s32.totalorder %s46, 0
    %s49 = sadd.s32 %s48, 1
    %s50 = scalar_select %p47, %s48, %s49
    %p53 = pneg %p47
    %p54 = scmp.eq.s32.totalorder %s12, 1
    %p55 = por %p53, %p54
    %p56 = scmp.ne.s32.totalorder %s48, %s51
    %p57 = scmp.eq.s32.totalorder %s12, 0
    %p58 = por %p56, %p57
    %p59 = scmp.ne.s32.totalorder %s48, %s51
    %p60 = scmp.eq.s32.totalorder %s17, 1
    %p61 = por %p59, %p60
    %p62 = scmp.ne.s32.totalorder %s51, %s52
    %p63 = scmp.eq.s32.totalorder %s17, 0
    %p64 = por %p62, %p63
    %p65 = scmp.ne.s32.totalorder %s51, %s52
    %p66 = scmp.eq.s32.totalorder %s18, 1
    %p67 = por %p65, %p66
    %p69 = scmp.ne.s32.totalorder %s52, %s68
    %p70 = scmp.eq.s32.totalorder %s18, 0
    %p71 = por %p69, %p70
    %s73 = sadd.s32 %s72, 1
    %p76 = scmp.eq.s32.totalorder %s12, 1
    %p77 = scmp.ne.s32.totalorder %s72, %s74
    %p78 = scmp.eq.s32.totalorder %s12, 0
    %p79 = por %p77, %p78
    %p80 = scmp.ne.s32.totalorder %s72, %s74
    %p81 = scmp.eq.s32.totalorder %s17, 1
    %p82 = por %p80, %p81
    %p83 = scmp.ne.s32.totalorder %s74, %s75
    %p84 = scmp.eq.s32.totalorder %s17, 0
    %p85 = por %p83, %p84
    %p86 = scmp.ne.s32.totalorder %s74, %s75
    %p87 = scmp.eq.s32.totalorder %s18, 1
    %p88 = por %p86, %p87
    %p90 = scmp.ne.s32.totalorder %s75, %s89
    %p91 = scmp.eq.s32.totalorder %s18, 0
    %p92 = por %p90, %p91
    %s94 = sadd.s32 %s93, 1
    %p97 = scmp.eq.s32.totalorder %s12, 1
    %p98 = scmp.ne.s32.totalorder %s93, %s95
    %p99 = scmp.eq.s32.totalorder %s12, 0
    %p100 = por %p98, %p99
    %p101 = scmp.ne.s32.totalorder %s93, %s95
    %p102 = scmp.eq.s32.totalorder %s17, 1
    %p103 = por %p101, %p102
    %p104 = scmp.ne.s32.totalorder %s95, %s96
    %p105 = scmp.eq.s32.totalorder %s17, 0
    %p106 = por %p104, %p105
    %p107 = scmp.ne.s32.totalorder %s95, %s96
    %p108 = scmp.eq.s32.totalorder %s18, 1
    %p109 = por %p107, %p108
    %p111 = scmp.ne.s32.totalorder %s96, %s110
    %p112 = scmp.eq.s32.totalorder %s18, 0
    %p113 = por %p111, %p112
    %s114 = ssub.s32 %s12, %s19
    %p115 = scmp.eq.s32.totalorder %s114, 0
    %s117 = sadd.s32 %s116, 1
    %s118 = scalar_select %p115, %s116, %s117
    %p121 = pneg %p115
    %p122 = scmp.eq.s32.totalorder %s12, 1
    %p123 = por %p121, %p122
    %p124 = scmp.ne.s32.totalorder %s116, %s119
    %p125 = scmp.eq.s32.totalorder %s12, 0
    %p126 = por %p124, %p125
    %p127 = scmp.ne.s32.totalorder %s116, %s119
    %p128 = scmp.eq.s32.totalorder %s17, 1
    %p129 = por %p127, %p128
    %p130 = scmp.ne.s32.totalorder %s119, %s120
    %p131 = scmp.eq.s32.totalorder %s17, 0
    %p132 = por %p130, %p131
    %p133 = scmp.ne.s32.totalorder %s119, %s120
    %p134 = scmp.eq.s32.totalorder %s18, 1
    %p135 = por %p133, %p134
    %p137 = scmp.ne.s32.totalorder %s120, %s136
    %p138 = scmp.eq.s32.totalorder %s18, 0
    %p139 = por %p137, %p138
    %s140 = ssub.s32 %s12, %s19
    %p141 = scmp.eq.s32.totalorder %s140, 0
    %s143 = sadd.s32 %s142, 1
    %s144 = scalar_select %p141, %s142, %s143
    %p147 = pneg %p141
    %p148 = scmp.eq.s32.totalorder %s12, 1
    %p149 = por %p147, %p148
    %p150 = scmp.ne.s32.totalorder %s142, %s145
    %p151 = scmp.eq.s32.totalorder %s12, 0
    %p152 = por %p150, %p151
    %p153 = scmp.ne.s32.totalorder %s142, %s145
    %p154 = scmp.eq.s32.totalorder %s17, 1
    %p155 = por %p153, %p154
    %p156 = scmp.ne.s32.totalorder %s145, %s146
    %p157 = scmp.eq.s32.totalorder %s17, 0
    %p158 = por %p156, %p157
    %p159 = scmp.ne.s32.totalorder %s145, %s146
    %p160 = scmp.eq.s32.totalorder %s18, 1
    %p161 = por %p159, %p160
    %p163 = scmp.ne.s32.totalorder %s146, %s162
    %p164 = scmp.eq.s32.totalorder %s18, 0
    %p165 = por %p163, %p164
    %p166 = scmp.le.s32.totalorder 1, %s12
    %p167 = scmp.lt.s32.totalorder %s12, 3
    %p168 = pnand %p166, %p167
    %p169 = pneg %p168
    // Predicated region
    $region9: #{forward.1} parent=5 // pred_check
      _
    $region10: #{forward.1} parent=5 // pred_check_branch
      %171 = sbr.rel (%p168) target = $region12
    $region11: #{forward.1} parent=5 // pred_region
      %s172 = ssub.s32 %s12, 1
      // Predicated region
      $region13: #{forward.1} parent=11 // pred_check
        %p173 = pneg %p85
      $region14: #{forward.1} parent=11 // pred_check_branch
        %175 = sbr.rel (%p173) target = $region16
      $region15: #{forward.1} parent=11 // pred_region
        _
      $region16: #{forward.1} parent=11 // pred_fallthru
        _
      // Predicated region
      $region17: #{forward.1} parent=11 // pred_check
        %p176 = pneg %p106
      $region18: #{forward.1} parent=11 // pred_check_branch
        %178 = sbr.rel (%p176) target = $region20
      $region19: #{forward.1} parent=11 // pred_region
        _
      $region20: #{forward.1} parent=11 // pred_fallthru
        _
    $region12: #{forward.1} parent=5 // pred_fallthru
      _
    %p179 = scmp.lt.s32.totalorder %s12, 2
    // Predicated region
    $region21: #{forward.1} parent=5 // pred_check
      %p180 = pneg %p179
    $region22: #{forward.1} parent=5 // pred_check_branch
      %182 = sbr.rel (%p180) target = $region24
    $region23: #{forward.1} parent=5 // pred_region
      // Predicated region
      $region25: #{forward.1} parent=23 // pred_check
        %p183 = pneg %p32
      $region26: #{forward.1} parent=23 // pred_check_branch
        %185 = sbr.rel (%p183) target = $region28
      $region27: #{forward.1} parent=23 // pred_region
        %s186 = smul.u32 8, %s12
        %p187 = scmp.lt.s32.totalorder %s186, 15
        %s188 = scalar_select %p187, %s186, 15
        %s189 = smul.addr %s188, 8
        %s190 = scalar_lea.vmem %s0, %s189
        %s191 = smul.u32 8, %s12
      $region28: #{forward.1} parent=23 // pred_fallthru
        _
      // Predicated region
      $region29: #{forward.1} parent=23 // pred_check
        %p192 = pneg %p58
      $region30: #{forward.1} parent=23 // pred_check_branch
        %194 = sbr.rel (%p192) target = $region32
      $region31: #{forward.1} parent=23 // pred_region
        %s195 = smul.u32 32, %s12
        %p196 = scmp.lt.s32.totalorder %s195, 63
        %s197 = scalar_select %p196, %s195, 63
        %s198 = smul.addr %s197, 8
        %s199 = scalar_lea.vmem %s1, %s198
        %s200 = smul.u32 32, %s12
      $region32: #{forward.1} parent=23 // pred_fallthru
        _
    $region24: #{forward.1} parent=5 // pred_fallthru
      _
    %p201 = scmp.le.s32.totalorder 1, %s12
    %p202 = scmp.lt.s32.totalorder %s12, 3
    %p203 = pnand %p201, %p202
    %p204 = pneg %p203
    // Predicated region
    $region33: #{forward.1} parent=5 // pred_check
      _
    $region34: #{forward.1} parent=5 // pred_check_branch
      %206 = sbr.rel (%p203) target = $region36
    $region35: #{forward.1} parent=5 // pred_region
      %s207 = ssub.s32 %s12, 1
      %s208 = smul.u32 8, %s17
      %p209 = scmp.lt.s32.totalorder %s208, 15
      %s210 = scalar_select %p209, %s208, 15
      %s211 = smul.addr %s210, 8
      %s212 = scalar_lea.vmem %s0, %s211
      %p213 = pneg %p38
      %p214 = pneg %p35
      %s215 = smul.u32 32, %s17
      %p216 = scmp.lt.s32.totalorder %s215, 63
      %s217 = scalar_select %p216, %s215, 63
      %s218 = smul.addr %s217, 8
      %s219 = scalar_lea.vmem %s1, %s218
      %p220 = pneg %p64
      %p221 = pneg %p61
      %p222 = pneg %p85
      %p223 = pneg %p82
      %p224 = pneg %p106
      %p225 = pneg %p103
      %p226 = pneg %p132
      %p227 = pneg %p129
      %s228 = smul.u32 8, %s17
      %p229 = scmp.lt.s32.totalorder %s228, 15
      %s230 = scalar_select %p229, %s228, 15
      %s231 = smul.addr %s230, 8
      %s232 = scalar_lea.vmem %s4, %s231
      %p233 = pneg %p158
      %p234 = pneg %p155
      %s235 = smul.u32 32, %s17
      %p236 = scmp.lt.s32.totalorder %s235, 63
      %s237 = scalar_select %p236, %s235, 63
      %s238 = smul.addr %s237, 8
      %s239 = scalar_lea.vmem %s5, %s238
      %s240 = smul.u32 8, %s17
      %p241 = scmp.lt.s32.totalorder %s240, 15
      %s242 = scalar_select %p241, %s240, 15
      %s243 = smul.addr %s242, 8
      %s244 = scalar_lea.vmem %s0, %s243
      %s245 = smul.u32 8, %s17
      %s246 = smul.u32 32, %s17
      %p247 = scmp.lt.s32.totalorder %s246, 63
      %s248 = scalar_select %p247, %s246, 63
      %s249 = smul.addr %s248, 8
      %s250 = scalar_lea.vmem %s1, %s249
      %s251 = smul.u32 32, %s17
      %s252 = smul.u32 8, %s17
      %p253 = scmp.lt.s32.totalorder %s252, 15
      %s254 = scalar_select %p253, %s252, 15
      %s255 = smul.addr %s254, 8
      %s256 = scalar_lea.vmem %s4, %s255
      %s257 = smul.u32 8, %s17
      %s258 = smul.u32 32, %s17
      %p259 = scmp.lt.s32.totalorder %s258, 63
      %s260 = scalar_select %p259, %s258, 63
      %s261 = smul.addr %s260, 8
      %s262 = scalar_lea.vmem %s5, %s261
      %s263 = smul.u32 32, %s17
      %v264 = vld [vmem:[%s244] sm:$0xff]
      %v265 = vld [vmem:[%s244 + $0x8] sm:$0xff]
      %v266 = vld [vmem:[%s244 + $0x10] sm:$0xff]
      %v267 = vld [vmem:[%s244 + $0x18] sm:$0xff]
      %v268 = vld [vmem:[%s244 + $0x20] sm:$0xff]
      %v269 = vld [vmem:[%s244 + $0x28] sm:$0xff]
      %v270 = vld [vmem:[%s244 + $0x30] sm:$0xff]
      %v271 = vld [vmem:[%s244 + $0x38] sm:$0xff]
      %v272 = vld [vmem:[%s2] sm:$0xf]
      %v273 = vld [vmem:[%s2 + $0x4] sm:$0xf]
      %v274 = vld [vmem:[%s2 + $0x8] sm:$0xf]
      %v275 = vld [vmem:[%s2 + $0xc] sm:$0xf]
      %v276 = vld [vmem:[%s2 + $0x10] sm:$0xf]
      %v277 = vld [vmem:[%s2 + $0x14] sm:$0xf]
      %v278 = vld [vmem:[%s2 + $0x18] sm:$0xf]
      %v279 = vld [vmem:[%s2 + $0x1c] sm:$0xf]
      %v280 = vld [vmem:[%s2 + $0x20] sm:$0xf]
      %v281 = vld [vmem:[%s2 + $0x24] sm:$0xf]
      %v282 = vld [vmem:[%s2 + $0x28] sm:$0xf]
      %v283 = vld [vmem:[%s2 + $0x2c] sm:$0xf]
      %v284 = vld [vmem:[%s2 + $0x30] sm:$0xf]
      %v285 = vld [vmem:[%s2 + $0x34] sm:$0xf]
      %v286 = vld [vmem:[%s2 + $0x38] sm:$0xf]
      %v287 = vld [vmem:[%s2 + $0x3c] sm:$0xf]
      %v288 = vld [vmem:[%s3] sm:$0x1]
      %v289 = vpack.c.bf16 %v265, %v264
      %v290 = vpack.c.bf16 %v267, %v266
      %v291 = vpack.c.bf16 %v269, %v268
      %v292 = vpack.c.bf16 %v271, %v270
      %v293 = vperm.slane %v288, 0
      %v310 = vunpack.c.l.b16 %v272
      %v311 = vunpack.c.l.b16 %v273
      %v312 = vunpack.c.l.b16 %v274
      %v313 = vunpack.c.l.b16 %v275
      %v314 = vunpack.c.l.b16 %v276
      %v315 = vunpack.c.l.b16 %v277
      %v316 = vunpack.c.l.b16 %v278
      %v317 = vunpack.c.l.b16 %v279
      %v318 = vunpack.c.l.b16 %v280
      %v319 = vunpack.c.l.b16 %v281
      %v320 = vunpack.c.l.b16 %v282
      %v321 = vunpack.c.l.b16 %v283
      %v322 = vunpack.c.l.b16 %v284
      %v323 = vunpack.c.l.b16 %v285
      %v324 = vunpack.c.l.b16 %v286
      %v325 = vunpack.c.l.b16 %v287
      %v326 = vpack.c.b16 %v311, %v310
      %v327 = vpack.c.b16 %v313, %v312
      %v328 = vpack.c.b16 %v315, %v314
      %v329 = vpack.c.b16 %v317, %v316
      %v330 = vpack.c.b16 %v319, %v318
      %v331 = vpack.c.b16 %v321, %v320
      %v332 = vpack.c.b16 %v323, %v322
      %v333 = vpack.c.b16 %v325, %v324
      %342 = vmatpush.bf16.msra.mxu0 %v333
      %343 = vmatpush.bf16.msra.mxu0 %v332
      %344 = vmatpush.bf16.msra.mxu0 %v331
      %345 = vmatpush.bf16.msra.mxu0 %v330
      %346 = vmatpush.bf16.msra.mxu0 %v329
      %347 = vmatpush.bf16.msra.mxu0 %v328
      %348 = vmatpush.bf16.msra.mxu0 %v327
      %349 = vmatpush.bf16.msra.mxu0 %v326
      %350 = vmatmul.bf16.gmra.mxu0 %v289
      %v351 = vpop.f32.mrf.mxu0
      %v352 = vadd.f32 %v293, %v351
      %v353 = vpop.f32.mrf.mxu0
      %v354 = vadd.f32 %v293, %v353
      %355 = vmatmul.bf16.gmra.mxu0 %v290
      %v356 = vpop.f32.mrf.mxu0
      %v357 = vadd.f32 %v293, %v356
      %v358 = vpop.f32.mrf.mxu0
      %v359 = vadd.f32 %v293, %v358
      %360 = vmatmul.bf16.gmra.mxu0 %v291
      %v361 = vpop.f32.mrf.mxu0
      %v362 = vadd.f32 %v293, %v361
      %v363 = vpop.f32.mrf.mxu0
      %v364 = vadd.f32 %v293, %v363
      %365 = vmatmul.bf16.gmra.mxu0 %v292
      %v366 = vpop.f32.mrf.mxu0
      %v367 = vadd.f32 %v293, %v366
      %v368 = vpop.f32.mrf.mxu0
      %v369 = vadd.f32 %v293, %v368
      %370 = vdwg.mxu0
      %v371 = vmax.f32 %v352, 0.0
      %v372 = vmax.f32 %v354, 0.0
      %v373 = vmax.f32 %v357, 0.0
      %v374 = vmax.f32 %v359, 0.0
      %v375 = vmax.f32 %v362, 0.0
      %v376 = vmax.f32 %v364, 0.0
      %v377 = vmax.f32 %v367, 0.0
      %v378 = vmax.f32 %v369, 0.0
      %v379 = vld [vmem:[%s2 + $0x40] sm:$0xf]
      %v380 = vld [vmem:[%s2 + $0x44] sm:$0xf]
      %v381 = vld [vmem:[%s2 + $0x48] sm:$0xf]
      %v382 = vld [vmem:[%s2 + $0x4c] sm:$0xf]
      %v383 = vld [vmem:[%s2 + $0x50] sm:$0xf]
      %v384 = vld [vmem:[%s2 + $0x54] sm:$0xf]
      %v385 = vld [vmem:[%s2 + $0x58] sm:$0xf]
      %v386 = vld [vmem:[%s2 + $0x5c] sm:$0xf]
      %v387 = vld [vmem:[%s2 + $0x60] sm:$0xf]
      %v388 = vld [vmem:[%s2 + $0x64] sm:$0xf]
      %v389 = vld [vmem:[%s2 + $0x68] sm:$0xf]
      %v390 = vld [vmem:[%s2 + $0x6c] sm:$0xf]
      %v391 = vld [vmem:[%s2 + $0x70] sm:$0xf]
      %v392 = vld [vmem:[%s2 + $0x74] sm:$0xf]
      %v393 = vld [vmem:[%s2 + $0x78] sm:$0xf]
      %v394 = vld [vmem:[%s2 + $0x7c] sm:$0xf]
      %v395 = vld [vmem:[%s3 + $0x1] sm:$0x1]
      %v396 = vpack.c.bf16 %v372, %v371
      %v397 = vpack.c.bf16 %v374, %v373
      %v398 = vpack.c.bf16 %v376, %v375
      %v399 = vpack.c.bf16 %v378, %v377
      %v400 = vperm.slane %v395, 0
      %v417 = vunpack.c.l.b16 %v379
      %v418 = vunpack.c.l.b16 %v380
      %v419 = vunpack.c.l.b16 %v381
      %v420 = vunpack.c.l.b16 %v382
      %v421 = vunpack.c.l.b16 %v383
      %v422 = vunpack.c.l.b16 %v384
      %v423 = vunpack.c.l.b16 %v385
      %v424 = vunpack.c.l.b16 %v386
      %v425 = vunpack.c.l.b16 %v387
      %v426 = vunpack.c.l.b16 %v388
      %v427 = vunpack.c.l.b16 %v389
      %v428 = vunpack.c.l.b16 %v390
      %v429 = vunpack.c.l.b16 %v391
      %v430 = vunpack.c.l.b16 %v392
      %v431 = vunpack.c.l.b16 %v393
      %v432 = vunpack.c.l.b16 %v394
      %v433 = vpack.c.b16 %v418, %v417
      %v434 = vpack.c.b16 %v420, %v419
      %v435 = vpack.c.b16 %v422, %v421
      %v436 = vpack.c.b16 %v424, %v423
      %v437 = vpack.c.b16 %v426, %v425
      %v438 = vpack.c.b16 %v428, %v427
      %v439 = vpack.c.b16 %v430, %v429
      %v440 = vpack.c.b16 %v432, %v431
      %449 = vmatpush.bf16.msra.mxu0 %v440
      %450 = vmatpush.bf16.msra.mxu0 %v439
      %451 = vmatpush.bf16.msra.mxu0 %v438
      %452 = vmatpush.bf16.msra.mxu0 %v437
      %453 = vmatpush.bf16.msra.mxu0 %v436
      %454 = vmatpush.bf16.msra.mxu0 %v435
      %455 = vmatpush.bf16.msra.mxu0 %v434
      %456 = vmatpush.bf16.msra.mxu0 %v433
      %457 = vmatmul.bf16.gmra.mxu0 %v396
      %v458 = vpop.f32.mrf.mxu0
      %v459 = vadd.f32 %v400, %v458
      %v460 = vpop.f32.mrf.mxu0
      %v461 = vadd.f32 %v400, %v460
      %462 = vmatmul.bf16.gmra.mxu0 %v397
      %v463 = vpop.f32.mrf.mxu0
      %v464 = vadd.f32 %v400, %v463
      %v465 = vpop.f32.mrf.mxu0
      %v466 = vadd.f32 %v400, %v465
      %467 = vmatmul.bf16.gmra.mxu0 %v398
      %v468 = vpop.f32.mrf.mxu0
      %v469 = vadd.f32 %v400, %v468
      %v470 = vpop.f32.mrf.mxu0
      %v471 = vadd.f32 %v400, %v470
      %472 = vmatmul.bf16.gmra.mxu0 %v399
      %v473 = vpop.f32.mrf.mxu0
      %v474 = vadd.f32 %v400, %v473
      %v475 = vpop.f32.mrf.mxu0
      %v476 = vadd.f32 %v400, %v475
      %477 = vdwg.mxu0
      %v478 = vmax.f32 %v459, 0.0
      %v479 = vmax.f32 %v461, 0.0
      %v480 = vmax.f32 %v464, 0.0
      %v481 = vmax.f32 %v466, 0.0
      %v482 = vmax.f32 %v469, 0.0
      %v483 = vmax.f32 %v471, 0.0
      %v484 = vmax.f32 %v474, 0.0
      %v485 = vmax.f32 %v476, 0.0
      %v486 = vld [vmem:[%s2 + $0x80] sm:$0xf]
      %v487 = vld [vmem:[%s2 + $0x84] sm:$0xf]
      %v488 = vld [vmem:[%s2 + $0x88] sm:$0xf]
      %v489 = vld [vmem:[%s2 + $0x8c] sm:$0xf]
      %v490 = vld [vmem:[%s2 + $0x90] sm:$0xf]
      %v491 = vld [vmem:[%s2 + $0x94] sm:$0xf]
      %v492 = vld [vmem:[%s2 + $0x98] sm:$0xf]
      %v493 = vld [vmem:[%s2 + $0x9c] sm:$0xf]
      %v494 = vld [vmem:[%s2 + $0xa0] sm:$0xf]
      %v495 = vld [vmem:[%s2 + $0xa4] sm:$0xf]
      %v496 = vld [vmem:[%s2 + $0xa8] sm:$0xf]
      %v497 = vld [vmem:[%s2 + $0xac] sm:$0xf]
      %v498 = vld [vmem:[%s2 + $0xb0] sm:$0xf]
      %v499 = vld [vmem:[%s2 + $0xb4] sm:$0xf]
      %v500 = vld [vmem:[%s2 + $0xb8] sm:$0xf]
      %v501 = vld [vmem:[%s2 + $0xbc] sm:$0xf]
      %v502 = vld [vmem:[%s3 + $0x2] sm:$0x1]
      %v503 = vpack.c.bf16 %v479, %v478
      %v504 = vpack.c.bf16 %v481, %v480
      %v505 = vpack.c.bf16 %v483, %v482
      %v506 = vpack.c.bf16 %v485, %v484
      %v507 = vperm.slane %v502, 0
      %v524 = vunpack.c.l.b16 %v486
      %v525 = vunpack.c.l.b16 %v487
      %v526 = vunpack.c.l.b16 %v488
      %v527 = vunpack.c.l.b16 %v489
      %v528 = vunpack.c.l.b16 %v490
      %v529 = vunpack.c.l.b16 %v491
      %v530 = vunpack.c.l.b16 %v492
      %v531 = vunpack.c.l.b16 %v493
      %v532 = vunpack.c.l.b16 %v494
      %v533 = vunpack.c.l.b16 %v495
      %v534 = vunpack.c.l.b16 %v496
      %v535 = vunpack.c.l.b16 %v497
      %v536 = vunpack.c.l.b16 %v498
      %v537 = vunpack.c.l.b16 %v499
      %v538 = vunpack.c.l.b16 %v500
      %v539 = vunpack.c.l.b16 %v501
      %v540 = vpack.c.b16 %v525, %v524
      %v541 = vpack.c.b16 %v527, %v526
      %v542 = vpack.c.b16 %v529, %v528
      %v543 = vpack.c.b16 %v531, %v530
      %v544 = vpack.c.b16 %v533, %v532
      %v545 = vpack.c.b16 %v535, %v534
      %v546 = vpack.c.b16 %v537, %v536
      %v547 = vpack.c.b16 %v539, %v538
      %556 = vmatpush.bf16.msra.mxu0 %v547
      %557 = vmatpush.bf16.msra.mxu0 %v546
      %558 = vmatpush.bf16.msra.mxu0 %v545
      %559 = vmatpush.bf16.msra.mxu0 %v544
      %560 = vmatpush.bf16.msra.mxu0 %v543
      %561 = vmatpush.bf16.msra.mxu0 %v542
      %562 = vmatpush.bf16.msra.mxu0 %v541
      %563 = vmatpush.bf16.msra.mxu0 %v540
      %564 = vmatmul.bf16.gmra.mxu0 %v503
      %v565 = vpop.f32.mrf.mxu0
      %v566 = vadd.f32 %v507, %v565
      %v567 = vpop.f32.mrf.mxu0
      %v568 = vadd.f32 %v507, %v567
      %569 = vmatmul.bf16.gmra.mxu0 %v504
      %v570 = vpop.f32.mrf.mxu0
      %v571 = vadd.f32 %v507, %v570
      %v572 = vpop.f32.mrf.mxu0
      %v573 = vadd.f32 %v507, %v572
      %574 = vmatmul.bf16.gmra.mxu0 %v505
      %v575 = vpop.f32.mrf.mxu0
      %v576 = vadd.f32 %v507, %v575
      %v577 = vpop.f32.mrf.mxu0
      %v578 = vadd.f32 %v507, %v577
      %579 = vmatmul.bf16.gmra.mxu0 %v506
      %v580 = vpop.f32.mrf.mxu0
      %v581 = vadd.f32 %v507, %v580
      %v582 = vpop.f32.mrf.mxu0
      %v583 = vadd.f32 %v507, %v582
      %584 = vdwg.mxu0
      %v585 = vmax.f32 %v566, 0.0
      %v586 = vmax.f32 %v568, 0.0
      %v587 = vmax.f32 %v571, 0.0
      %v588 = vmax.f32 %v573, 0.0
      %v589 = vmax.f32 %v576, 0.0
      %v590 = vmax.f32 %v578, 0.0
      %v591 = vmax.f32 %v581, 0.0
      %v592 = vmax.f32 %v583, 0.0
      %v593 = vld [vmem:[%s2 + $0xc0] sm:$0xf]
      %v594 = vld [vmem:[%s2 + $0xc4] sm:$0xf]
      %v595 = vld [vmem:[%s2 + $0xc8] sm:$0xf]
      %v596 = vld [vmem:[%s2 + $0xcc] sm:$0xf]
      %v597 = vld [vmem:[%s2 + $0xd0] sm:$0xf]
      %v598 = vld [vmem:[%s2 + $0xd4] sm:$0xf]
      %v599 = vld [vmem:[%s2 + $0xd8] sm:$0xf]
      %v600 = vld [vmem:[%s2 + $0xdc] sm:$0xf]
      %v601 = vld [vmem:[%s2 + $0xe0] sm:$0xf]
      %v602 = vld [vmem:[%s2 + $0xe4] sm:$0xf]
      %v603 = vld [vmem:[%s2 + $0xe8] sm:$0xf]
      %v604 = vld [vmem:[%s2 + $0xec] sm:$0xf]
      %v605 = vld [vmem:[%s2 + $0xf0] sm:$0xf]
      %v606 = vld [vmem:[%s2 + $0xf4] sm:$0xf]
      %v607 = vld [vmem:[%s2 + $0xf8] sm:$0xf]
      %v608 = vld [vmem:[%s2 + $0xfc] sm:$0xf]
      %v609 = vld [vmem:[%s3 + $0x3] sm:$0x1]
      %v610 = vpack.c.bf16 %v586, %v585
      %v611 = vpack.c.bf16 %v588, %v587
      %v612 = vpack.c.bf16 %v590, %v589
      %v613 = vpack.c.bf16 %v592, %v591
      %v614 = vperm.slane %v609, 0
      %v631 = vunpack.c.l.b16 %v593
      %v632 = vunpack.c.l.b16 %v594
      %v633 = vunpack.c.l.b16 %v595
      %v634 = vunpack.c.l.b16 %v596
      %v635 = vunpack.c.l.b16 %v597
      %v636 = vunpack.c.l.b16 %v598
      %v637 = vunpack.c.l.b16 %v599
      %v638 = vunpack.c.l.b16 %v600
      %v639 = vunpack.c.l.b16 %v601
      %v640 = vunpack.c.l.b16 %v602
      %v641 = vunpack.c.l.b16 %v603
      %v642 = vunpack.c.l.b16 %v604
      %v643 = vunpack.c.l.b16 %v605
      %v644 = vunpack.c.l.b16 %v606
      %v645 = vunpack.c.l.b16 %v607
      %v646 = vunpack.c.l.b16 %v608
      %v647 = vpack.c.b16 %v632, %v631
      %v648 = vpack.c.b16 %v634, %v633
      %v649 = vpack.c.b16 %v636, %v635
      %v650 = vpack.c.b16 %v638, %v637
      %v651 = vpack.c.b16 %v640, %v639
      %v652 = vpack.c.b16 %v642, %v641
      %v653 = vpack.c.b16 %v644, %v643
      %v654 = vpack.c.b16 %v646, %v645
      %663 = vmatpush.bf16.msra.mxu0 %v654
      %664 = vmatpush.bf16.msra.mxu0 %v653
      %665 = vmatpush.bf16.msra.mxu0 %v652
      %666 = vmatpush.bf16.msra.mxu0 %v651
      %667 = vmatpush.bf16.msra.mxu0 %v650
      %668 = vmatpush.bf16.msra.mxu0 %v649
      %669 = vmatpush.bf16.msra.mxu0 %v648
      %670 = vmatpush.bf16.msra.mxu0 %v647
      %671 = vmatmul.bf16.gmra.mxu0 %v610
      %v672 = vpop.f32.mrf.mxu0
      %v673 = vadd.f32 %v614, %v672
      %v674 = vpop.f32.mrf.mxu0
      %v675 = vadd.f32 %v614, %v674
      %676 = vmatmul.bf16.gmra.mxu0 %v611
      %v677 = vpop.f32.mrf.mxu0
      %v678 = vadd.f32 %v614, %v677
      %v679 = vpop.f32.mrf.mxu0
      %v680 = vadd.f32 %v614, %v679
      %681 = vmatmul.bf16.gmra.mxu0 %v612
      %v682 = vpop.f32.mrf.mxu0
      %v683 = vadd.f32 %v614, %v682
      %v684 = vpop.f32.mrf.mxu0
      %v685 = vadd.f32 %v614, %v684
      %686 = vmatmul.bf16.gmra.mxu0 %v613
      %v687 = vpop.f32.mrf.mxu0
      %v688 = vadd.f32 %v614, %v687
      %v689 = vpop.f32.mrf.mxu0
      %v690 = vadd.f32 %v614, %v689
      %691 = vdwg.mxu0
      %692 = vst [vmem:[%s256] sm:$0xff] %v673
      %693 = vst [vmem:[%s256 + $0x8] sm:$0xff] %v675
      %694 = vst [vmem:[%s256 + $0x10] sm:$0xff] %v678
      %695 = vst [vmem:[%s256 + $0x18] sm:$0xff] %v680
      %696 = vst [vmem:[%s256 + $0x20] sm:$0xff] %v683
      %697 = vst [vmem:[%s256 + $0x28] sm:$0xff] %v685
      %698 = vst [vmem:[%s256 + $0x30] sm:$0xff] %v688
      %699 = vst [vmem:[%s256 + $0x38] sm:$0xff] %v690
      %v700 = vmul.f32 %v673, 0.5
      %v701 = vmul.f32 %v675, 0.5
      %v702 = vmul.f32 %v678, 0.5
      %v703 = vmul.f32 %v680, 0.5
      %v704 = vmul.f32 %v683, 0.5
      %v705 = vmul.f32 %v685, 0.5
      %v706 = vmul.f32 %v688, 0.5
      %v707 = vmul.f32 %v690, 0.5
      %v708 = vmul.f32 %v700, 1.442695
      %v709 = vpow.pop %v708
      %v710 = vmul.f32 %v701, 1.442695
      %v711 = vpow.pop %v710
      %v712 = vmul.f32 %v702, 1.442695
      %v713 = vpow.pop %v712
      %v714 = vmul.f32 %v703, 1.442695
      %v715 = vpow.pop %v714
      %v716 = vmul.f32 %v704, 1.442695
      %v717 = vpow.pop %v716
      %v718 = vmul.f32 %v705, 1.442695
      %v719 = vpow.pop %v718
      %v720 = vmul.f32 %v706, 1.442695
      %v721 = vpow.pop %v720
      %v722 = vmul.f32 %v707, 1.442695
      %v723 = vpow.pop %v722
      %v724 = vld [vmem:[%s250] sm:$0xff]
      %v725 = vld [vmem:[%s250 + $0x8] sm:$0xff]
      %v726 = vld [vmem:[%s250 + $0x10] sm:$0xff]
      %v727 = vld [vmem:[%s250 + $0x18] sm:$0xff]
      %v728 = vld [vmem:[%s250 + $0x20] sm:$0xff]
      %v729 = vld [vmem:[%s250 + $0x28] sm:$0xff]
      %v730 = vld [vmem:[%s250 + $0x30] sm:$0xff]
      %v731 = vld [vmem:[%s250 + $0x38] sm:$0xff]
      %v732 = vld [vmem:[%s250 + $0x40] sm:$0xff]
      %v733 = vld [vmem:[%s250 + $0x48] sm:$0xff]
      %v734 = vld [vmem:[%s250 + $0x50] sm:$0xff]
      %v735 = vld [vmem:[%s250 + $0x58] sm:$0xff]
      %v736 = vld [vmem:[%s250 + $0x60] sm:$0xff]
      %v737 = vld [vmem:[%s250 + $0x68] sm:$0xff]
      %v738 = vld [vmem:[%s250 + $0x70] sm:$0xff]
      %v739 = vld [vmem:[%s250 + $0x78] sm:$0xff]
      %v740 = vld [vmem:[%s250 + $0x80] sm:$0xff]
      %v741 = vld [vmem:[%s250 + $0x88] sm:$0xff]
      %v742 = vld [vmem:[%s250 + $0x90] sm:$0xff]
      %v743 = vld [vmem:[%s250 + $0x98] sm:$0xff]
      %v744 = vld [vmem:[%s250 + $0xa0] sm:$0xff]
      %v745 = vld [vmem:[%s250 + $0xa8] sm:$0xff]
      %v746 = vld [vmem:[%s250 + $0xb0] sm:$0xff]
      %v747 = vld [vmem:[%s250 + $0xb8] sm:$0xff]
      %v748 = vld [vmem:[%s250 + $0xc0] sm:$0xff]
      %v749 = vld [vmem:[%s250 + $0xc8] sm:$0xff]
      %v750 = vld [vmem:[%s250 + $0xd0] sm:$0xff]
      %v751 = vld [vmem:[%s250 + $0xd8] sm:$0xff]
      %v752 = vld [vmem:[%s250 + $0xe0] sm:$0xff]
      %v753 = vld [vmem:[%s250 + $0xe8] sm:$0xff]
      %v754 = vld [vmem:[%s250 + $0xf0] sm:$0xff]
      %v755 = vld [vmem:[%s250 + $0xf8] sm:$0xff]
      %v756 = vlaneseq
      %v757 = vand.u32 %v756, 127
      %vm758 = vcmp.lt.s32.totalorder %v757, 8
      %v759 = vmul.f32 %v724, %v709
      %v760 = vmul.f32 %v725, %v711
      %v761 = vmul.f32 %v726, %v713
      %v762 = vmul.f32 %v727, %v715
      %v763 = vmul.f32 %v728, %v717
      %v764 = vmul.f32 %v729, %v719
      %v765 = vmul.f32 %v730, %v721
      %v766 = vmul.f32 %v731, %v723
      %v767 = vmul.f32 %v732, %v709
      %v768 = vmul.f32 %v733, %v711
      %v769 = vmul.f32 %v734, %v713
      %v770 = vmul.f32 %v735, %v715
      %v771 = vmul.f32 %v736, %v717
      %v772 = vmul.f32 %v737, %v719
      %v773 = vmul.f32 %v738, %v721
      %v774 = vmul.f32 %v739, %v723
      %v775 = vmul.f32 %v740, %v709
      %v776 = vmul.f32 %v741, %v711
      %v777 = vmul.f32 %v742, %v713
      %v778 = vmul.f32 %v743, %v715
      %v779 = vmul.f32 %v744, %v717
      %v780 = vmul.f32 %v745, %v719
      %v781 = vmul.f32 %v746, %v721
      %v782 = vmul.f32 %v747, %v723
      %v783 = vmul.f32 %v748, %v709
      %v784 = vmul.f32 %v749, %v711
      %v785 = vmul.f32 %v750, %v713
      %v786 = vmul.f32 %v751, %v715
      %v787 = vmul.f32 %v752, %v717
      %v788 = vmul.f32 %v753, %v719
      %v789 = vmul.f32 %v754, %v721
      %v790 = vmul.f32 %v755, %v723
      %v791 = vsel %vm758, 1, 0
      %vm792 = vcmp.eq.s32.totalorder %v791, 1
      %v793 = vsel %vm792, %v673, %v759
      %v794 = vsel %vm792, %v675, %v760
      %v795 = vsel %vm792, %v678, %v761
      %v796 = vsel %vm792, %v680, %v762
      %v797 = vsel %vm792, %v683, %v763
      %v798 = vsel %vm792, %v685, %v764
      %v799 = vsel %vm792, %v688, %v765
      %v800 = vsel %vm792, %v690, %v766
      %v801 = vsel %vm792, %v673, %v767
      %v802 = vsel %vm792, %v675, %v768
      %v803 = vsel %vm792, %v678, %v769
      %v804 = vsel %vm792, %v680, %v770
      %v805 = vsel %vm792, %v683, %v771
      %v806 = vsel %vm792, %v685, %v772
      %v807 = vsel %vm792, %v688, %v773
      %v808 = vsel %vm792, %v690, %v774
      %v809 = vsel %vm792, %v673, %v775
      %v810 = vsel %vm792, %v675, %v776
      %v811 = vsel %vm792, %v678, %v777
      %v812 = vsel %vm792, %v680, %v778
      %v813 = vsel %vm792, %v683, %v779
      %v814 = vsel %vm792, %v685, %v780
      %v815 = vsel %vm792, %v688, %v781
      %v816 = vsel %vm792, %v690, %v782
      %v817 = vsel %vm792, %v673, %v783
      %v818 = vsel %vm792, %v675, %v784
      %v819 = vsel %vm792, %v678, %v785
      %v820 = vsel %vm792, %v680, %v786
      %v821 = vsel %vm792, %v683, %v787
      %v822 = vsel %vm792, %v685, %v788
      %v823 = vsel %vm792, %v688, %v789
      %v824 = vsel %vm792, %v690, %v790
      %v825 = vld [vmem:[%s2 + $0x100] sm:$0xf]
      %v826 = vld [vmem:[%s2 + $0x104] sm:$0xf]
      %v827 = vld [vmem:[%s2 + $0x108] sm:$0xf]
      %v828 = vld [vmem:[%s2 + $0x10c] sm:$0xf]
      %v829 = vld [vmem:[%s2 + $0x110] sm:$0xf]
      %v830 = vld [vmem:[%s2 + $0x114] sm:$0xf]
      %v831 = vld [vmem:[%s2 + $0x118] sm:$0xf]
      %v832 = vld [vmem:[%s2 + $0x11c] sm:$0xf]
      %v833 = vld [vmem:[%s2 + $0x120] sm:$0xf]
      %v834 = vld [vmem:[%s2 + $0x124] sm:$0xf]
      %v835 = vld [vmem:[%s2 + $0x128] sm:$0xf]
      %v836 = vld [vmem:[%s2 + $0x12c] sm:$0xf]
      %v837 = vld [vmem:[%s2 + $0x130] sm:$0xf]
      %v838 = vld [vmem:[%s2 + $0x134] sm:$0xf]
      %v839 = vld [vmem:[%s2 + $0x138] sm:$0xf]
      %v840 = vld [vmem:[%s2 + $0x13c] sm:$0xf]
      %v841 = vld [vmem:[%s3 + $0x4] sm:$0x1]
      %v842 = vpack.c.bf16 %v794, %v793
      %v843 = vpack.c.bf16 %v796, %v795
      %v844 = vpack.c.bf16 %v798, %v797
      %v845 = vpack.c.bf16 %v800, %v799
      %v846 = vpack.c.bf16 %v802, %v801
      %v847 = vpack.c.bf16 %v804, %v803
      %v848 = vpack.c.bf16 %v806, %v805
      %v849 = vpack.c.bf16 %v808, %v807
      %v850 = vpack.c.bf16 %v810, %v809
      %v851 = vpack.c.bf16 %v812, %v811
      %v852 = vpack.c.bf16 %v814, %v813
      %v853 = vpack.c.bf16 %v816, %v815
      %v854 = vpack.c.bf16 %v818, %v817
      %v855 = vpack.c.bf16 %v820, %v819
      %v856 = vpack.c.bf16 %v822, %v821
      %v857 = vpack.c.bf16 %v824, %v823
      %v858 = vperm.slane %v841, 0
      %v875 = vunpack.c.l.b16 %v825
      %v876 = vunpack.c.l.b16 %v826
      %v877 = vunpack.c.l.b16 %v827
      %v878 = vunpack.c.l.b16 %v828
      %v879 = vunpack.c.l.b16 %v829
      %v880 = vunpack.c.l.b16 %v830
      %v881 = vunpack.c.l.b16 %v831
      %v882 = vunpack.c.l.b16 %v832
      %v883 = vunpack.c.l.b16 %v833
      %v884 = vunpack.c.l.b16 %v834
      %v885 = vunpack.c.l.b16 %v835
      %v886 = vunpack.c.l.b16 %v836
      %v887 = vunpack.c.l.b16 %v837
      %v888 = vunpack.c.l.b16 %v838
      %v889 = vunpack.c.l.b16 %v839
      %v890 = vunpack.c.l.b16 %v840
      %v891 = vpack.c.b16 %v876, %v875
      %v892 = vpack.c.b16 %v878, %v877
      %v893 = vpack.c.b16 %v880, %v879
      %v894 = vpack.c.b16 %v882, %v881
      %v895 = vpack.c.b16 %v884, %v883
      %v896 = vpack.c.b16 %v886, %v885
      %v897 = vpack.c.b16 %v888, %v887
      %v898 = vpack.c.b16 %v890, %v889
      %907 = vmatpush.bf16.msra.mxu0 %v898
      %908 = vmatpush.bf16.msra.mxu0 %v897
      %909 = vmatpush.bf16.msra.mxu0 %v896
      %910 = vmatpush.bf16.msra.mxu0 %v895
      %911 = vmatpush.bf16.msra.mxu0 %v894
      %912 = vmatpush.bf16.msra.mxu0 %v893
      %913 = vmatpush.bf16.msra.mxu0 %v892
      %914 = vmatpush.bf16.msra.mxu0 %v891
      %915 = vmatmul.bf16.gmra.mxu0 %v842
      %v916 = vpop.f32.mrf.mxu0
      %v917 = vadd.f32 %v858, %v916
      %v918 = vpop.f32.mrf.mxu0
      %v919 = vadd.f32 %v858, %v918
      %920 = vmatmul.bf16.gmra.mxu0 %v843
      %v921 = vpop.f32.mrf.mxu0
      %v922 = vadd.f32 %v858, %v921
      %v923 = vpop.f32.mrf.mxu0
      %v924 = vadd.f32 %v858, %v923
      %925 = vmatmul.bf16.gmra.mxu0 %v844
      %v926 = vpop.f32.mrf.mxu0
      %v927 = vadd.f32 %v858, %v926
      %v928 = vpop.f32.mrf.mxu0
      %v929 = vadd.f32 %v858, %v928
      %930 = vmatmul.bf16.gmra.mxu0 %v845
      %v931 = vpop.f32.mrf.mxu0
      %v932 = vadd.f32 %v858, %v931
      %v933 = vpop.f32.mrf.mxu0
      %v934 = vadd.f32 %v858, %v933
      %935 = vmatmul.bf16.gmra.mxu0 %v846
      %v936 = vpop.f32.mrf.mxu0
      %v937 = vadd.f32 %v858, %v936
      %v938 = vpop.f32.mrf.mxu0
      %v939 = vadd.f32 %v858, %v938
      %940 = vmatmul.bf16.gmra.mxu0 %v847
      %v941 = vpop.f32.mrf.mxu0
      %v942 = vadd.f32 %v858, %v941
      %v943 = vpop.f32.mrf.mxu0
      %v944 = vadd.f32 %v858, %v943
      %945 = vmatmul.bf16.gmra.mxu0 %v848
      %v946 = vpop.f32.mrf.mxu0
      %v947 = vadd.f32 %v858, %v946
      %v948 = vpop.f32.mrf.mxu0
      %v949 = vadd.f32 %v858, %v948
      %950 = vmatmul.bf16.gmra.mxu0 %v849
      %v951 = vpop.f32.mrf.mxu0
      %v952 = vadd.f32 %v858, %v951
      %v953 = vpop.f32.mrf.mxu0
      %v954 = vadd.f32 %v858, %v953
      %955 = vmatmul.bf16.gmra.mxu0 %v850
      %v956 = vpop.f32.mrf.mxu0
      %v957 = vadd.f32 %v858, %v956
      %v958 = vpop.f32.mrf.mxu0
      %v959 = vadd.f32 %v858, %v958
      %960 = vmatmul.bf16.gmra.mxu0 %v851
      %v961 = vpop.f32.mrf.mxu0
      %v962 = vadd.f32 %v858, %v961
      %v963 = vpop.f32.mrf.mxu0
      %v964 = vadd.f32 %v858, %v963
      %965 = vmatmul.bf16.gmra.mxu0 %v852
      %v966 = vpop.f32.mrf.mxu0
      %v967 = vadd.f32 %v858, %v966
      %v968 = vpop.f32.mrf.mxu0
      %v969 = vadd.f32 %v858, %v968
      %970 = vmatmul.bf16.gmra.mxu0 %v853
      %v971 = vpop.f32.mrf.mxu0
      %v972 = vadd.f32 %v858, %v971
      %v973 = vpop.f32.mrf.mxu0
      %v974 = vadd.f32 %v858, %v973
      %975 = vmatmul.bf16.gmra.mxu0 %v854
      %v976 = vpop.f32.mrf.mxu0
      %v977 = vadd.f32 %v858, %v976
      %v978 = vpop.f32.mrf.mxu0
      %v979 = vadd.f32 %v858, %v978
      %980 = vmatmul.bf16.gmra.mxu0 %v855
      %v981 = vpop.f32.mrf.mxu0
      %v982 = vadd.f32 %v858, %v981
      %v983 = vpop.f32.mrf.mxu0
      %v984 = vadd.f32 %v858, %v983
      %985 = vmatmul.bf16.gmra.mxu0 %v856
      %v986 = vpop.f32.mrf.mxu0
      %v987 = vadd.f32 %v858, %v986
      %v988 = vpop.f32.mrf.mxu0
      %v989 = vadd.f32 %v858, %v988
      %990 = vmatmul.bf16.gmra.mxu0 %v857
      %v991 = vpop.f32.mrf.mxu0
      %v992 = vadd.f32 %v858, %v991
      %v993 = vpop.f32.mrf.mxu0
      %v994 = vadd.f32 %v858, %v993
      %995 = vdwg.mxu0
      %v996 = vmax.f32 %v917, 0.0
      %v997 = vmax.f32 %v919, 0.0
      %v998 = vmax.f32 %v922, 0.0
      %v999 = vmax.f32 %v924, 0.0
      %v1000 = vmax.f32 %v927, 0.0
      %v1001 = vmax.f32 %v929, 0.0
      %v1002 = vmax.f32 %v932, 0.0
      %v1003 = vmax.f32 %v934, 0.0
      %v1004 = vmax.f32 %v937, 0.0
      %v1005 = vmax.f32 %v939, 0.0
      %v1006 = vmax.f32 %v942, 0.0
      %v1007 = vmax.f32 %v944, 0.0
      %v1008 = vmax.f32 %v947, 0.0
      %v1009 = vmax.f32 %v949, 0.0
      %v1010 = vmax.f32 %v952, 0.0
      %v1011 = vmax.f32 %v954, 0.0
      %v1012 = vmax.f32 %v957, 0.0
      %v1013 = vmax.f32 %v959, 0.0
      %v1014 = vmax.f32 %v962, 0.0
      %v1015 = vmax.f32 %v964, 0.0
      %v1016 = vmax.f32 %v967, 0.0
      %v1017 = vmax.f32 %v969, 0.0
      %v1018 = vmax.f32 %v972, 0.0
      %v1019 = vmax.f32 %v974, 0.0
      %v1020 = vmax.f32 %v977, 0.0
      %v1021 = vmax.f32 %v979, 0.0
      %v1022 = vmax.f32 %v982, 0.0
      %v1023 = vmax.f32 %v984, 0.0
      %v1024 = vmax.f32 %v987, 0.0
      %v1025 = vmax.f32 %v989, 0.0
      %v1026 = vmax.f32 %v992, 0.0
      %v1027 = vmax.f32 %v994, 0.0
      %v1028 = vld [vmem:[%s2 + $0x140] sm:$0xf]
      %v1029 = vld [vmem:[%s2 + $0x144] sm:$0xf]
      %v1030 = vld [vmem:[%s2 + $0x148] sm:$0xf]
      %v1031 = vld [vmem:[%s2 + $0x14c] sm:$0xf]
      %v1032 = vld [vmem:[%s2 + $0x150] sm:$0xf]
      %v1033 = vld [vmem:[%s2 + $0x154] sm:$0xf]
      %v1034 = vld [vmem:[%s2 + $0x158] sm:$0xf]
      %v1035 = vld [vmem:[%s2 + $0x15c] sm:$0xf]
      %v1036 = vld [vmem:[%s2 + $0x160] sm:$0xf]
      %v1037 = vld [vmem:[%s2 + $0x164] sm:$0xf]
      %v1038 = vld [vmem:[%s2 + $0x168] sm:$0xf]
      %v1039 = vld [vmem:[%s2 + $0x16c] sm:$0xf]
      %v1040 = vld [vmem:[%s2 + $0x170] sm:$0xf]
      %v1041 = vld [vmem:[%s2 + $0x174] sm:$0xf]
      %v1042 = vld [vmem:[%s2 + $0x178] sm:$0xf]
      %v1043 = vld [vmem:[%s2 + $0x17c] sm:$0xf]
      %v1044 = vld [vmem:[%s3 + $0x5] sm:$0x1]
      %v1045 = vpack.c.bf16 %v997, %v996
      %v1046 = vpack.c.bf16 %v999, %v998
      %v1047 = vpack.c.bf16 %v1001, %v1000
      %v1048 = vpack.c.bf16 %v1003, %v1002
      %v1049 = vpack.c.bf16 %v1005, %v1004
      %v1050 = vpack.c.bf16 %v1007, %v1006
      %v1051 = vpack.c.bf16 %v1009, %v1008
      %v1052 = vpack.c.bf16 %v1011, %v1010
      %v1053 = vpack.c.bf16 %v1013, %v1012
      %v1054 = vpack.c.bf16 %v1015, %v1014
      %v1055 = vpack.c.bf16 %v1017, %v1016
      %v1056 = vpack.c.bf16 %v1019, %v1018
      %v1057 = vpack.c.bf16 %v1021, %v1020
      %v1058 = vpack.c.bf16 %v1023, %v1022
      %v1059 = vpack.c.bf16 %v1025, %v1024
      %v1060 = vpack.c.bf16 %v1027, %v1026
      %v1061 = vperm.slane %v1044, 0
      %v1078 = vunpack.c.l.b16 %v1028
      %v1079 = vunpack.c.l.b16 %v1029
      %v1080 = vunpack.c.l.b16 %v1030
      %v1081 = vunpack.c.l.b16 %v1031
      %v1082 = vunpack.c.l.b16 %v1032
      %v1083 = vunpack.c.l.b16 %v1033
      %v1084 = vunpack.c.l.b16 %v1034
      %v1085 = vunpack.c.l.b16 %v1035
      %v1086 = vunpack.c.l.b16 %v1036
      %v1087 = vunpack.c.l.b16 %v1037
      %v1088 = vunpack.c.l.b16 %v1038
      %v1089 = vunpack.c.l.b16 %v1039
      %v1090 = vunpack.c.l.b16 %v1040
      %v1091 = vunpack.c.l.b16 %v1041
      %v1092 = vunpack.c.l.b16 %v1042
      %v1093 = vunpack.c.l.b16 %v1043
      %v1094 = vpack.c.b16 %v1079, %v1078
      %v1095 = vpack.c.b16 %v1081, %v1080
      %v1096 = vpack.c.b16 %v1083, %v1082
      %v1097 = vpack.c.b16 %v1085, %v1084
      %v1098 = vpack.c.b16 %v1087, %v1086
      %v1099 = vpack.c.b16 %v1089, %v1088
      %v1100 = vpack.c.b16 %v1091, %v1090
      %v1101 = vpack.c.b16 %v1093, %v1092
      %1110 = vmatpush.bf16.msra.mxu0 %v1101
      %1111 = vmatpush.bf16.msra.mxu0 %v1100
      %1112 = vmatpush.bf16.msra.mxu0 %v1099
      %1113 = vmatpush.bf16.msra.mxu0 %v1098
      %1114 = vmatpush.bf16.msra.mxu0 %v1097
      %1115 = vmatpush.bf16.msra.mxu0 %v1096
      %1116 = vmatpush.bf16.msra.mxu0 %v1095
      %1117 = vmatpush.bf16.msra.mxu0 %v1094
      %1118 = vmatmul.bf16.gmra.mxu0 %v1045
      %v1119 = vpop.f32.mrf.mxu0
      %v1120 = vadd.f32 %v1061, %v1119
      %v1121 = vpop.f32.mrf.mxu0
      %v1122 = vadd.f32 %v1061, %v1121
      %1123 = vmatmul.bf16.gmra.mxu0 %v1046
      %v1124 = vpop.f32.mrf.mxu0
      %v1125 = vadd.f32 %v1061, %v1124
      %v1126 = vpop.f32.mrf.mxu0
      %v1127 = vadd.f32 %v1061, %v1126
      %1128 = vmatmul.bf16.gmra.mxu0 %v1047
      %v1129 = vpop.f32.mrf.mxu0
      %v1130 = vadd.f32 %v1061, %v1129
      %v1131 = vpop.f32.mrf.mxu0
      %v1132 = vadd.f32 %v1061, %v1131
      %1133 = vmatmul.bf16.gmra.mxu0 %v1048
      %v1134 = vpop.f32.mrf.mxu0
      %v1135 = vadd.f32 %v1061, %v1134
      %v1136 = vpop.f32.mrf.mxu0
      %v1137 = vadd.f32 %v1061, %v1136
      %1138 = vmatmul.bf16.gmra.mxu0 %v1049
      %v1139 = vpop.f32.mrf.mxu0
      %v1140 = vadd.f32 %v1061, %v1139
      %v1141 = vpop.f32.mrf.mxu0
      %v1142 = vadd.f32 %v1061, %v1141
      %1143 = vmatmul.bf16.gmra.mxu0 %v1050
      %v1144 = vpop.f32.mrf.mxu0
      %v1145 = vadd.f32 %v1061, %v1144
      %v1146 = vpop.f32.mrf.mxu0
      %v1147 = vadd.f32 %v1061, %v1146
      %1148 = vmatmul.bf16.gmra.mxu0 %v1051
      %v1149 = vpop.f32.mrf.mxu0
      %v1150 = vadd.f32 %v1061, %v1149
      %v1151 = vpop.f32.mrf.mxu0
      %v1152 = vadd.f32 %v1061, %v1151
      %1153 = vmatmul.bf16.gmra.mxu0 %v1052
      %v1154 = vpop.f32.mrf.mxu0
      %v1155 = vadd.f32 %v1061, %v1154
      %v1156 = vpop.f32.mrf.mxu0
      %v1157 = vadd.f32 %v1061, %v1156
      %1158 = vmatmul.bf16.gmra.mxu0 %v1053
      %v1159 = vpop.f32.mrf.mxu0
      %v1160 = vadd.f32 %v1061, %v1159
      %v1161 = vpop.f32.mrf.mxu0
      %v1162 = vadd.f32 %v1061, %v1161
      %1163 = vmatmul.bf16.gmra.mxu0 %v1054
      %v1164 = vpop.f32.mrf.mxu0
      %v1165 = vadd.f32 %v1061, %v1164
      %v1166 = vpop.f32.mrf.mxu0
      %v1167 = vadd.f32 %v1061, %v1166
      %1168 = vmatmul.bf16.gmra.mxu0 %v1055
      %v1169 = vpop.f32.mrf.mxu0
      %v1170 = vadd.f32 %v1061, %v1169
      %v1171 = vpop.f32.mrf.mxu0
      %v1172 = vadd.f32 %v1061, %v1171
      %1173 = vmatmul.bf16.gmra.mxu0 %v1056
      %v1174 = vpop.f32.mrf.mxu0
      %v1175 = vadd.f32 %v1061, %v1174
      %v1176 = vpop.f32.mrf.mxu0
      %v1177 = vadd.f32 %v1061, %v1176
      %1178 = vmatmul.bf16.gmra.mxu0 %v1057
      %v1179 = vpop.f32.mrf.mxu0
      %v1180 = vadd.f32 %v1061, %v1179
      %v1181 = vpop.f32.mrf.mxu0
      %v1182 = vadd.f32 %v1061, %v1181
      %1183 = vmatmul.bf16.gmra.mxu0 %v1058
      %v1184 = vpop.f32.mrf.mxu0
      %v1185 = vadd.f32 %v1061, %v1184
      %v1186 = vpop.f32.mrf.mxu0
      %v1187 = vadd.f32 %v1061, %v1186
      %1188 = vmatmul.bf16.gmra.mxu0 %v1059
      %v1189 = vpop.f32.mrf.mxu0
      %v1190 = vadd.f32 %v1061, %v1189
      %v1191 = vpop.f32.mrf.mxu0
      %v1192 = vadd.f32 %v1061, %v1191
      %1193 = vmatmul.bf16.gmra.mxu0 %v1060
      %v1194 = vpop.f32.mrf.mxu0
      %v1195 = vadd.f32 %v1061, %v1194
      %v1196 = vpop.f32.mrf.mxu0
      %v1197 = vadd.f32 %v1061, %v1196
      %1198 = vdwg.mxu0
      %v1199 = vmax.f32 %v1120, 0.0
      %v1200 = vmax.f32 %v1122, 0.0
      %v1201 = vmax.f32 %v1125, 0.0
      %v1202 = vmax.f32 %v1127, 0.0
      %v1203 = vmax.f32 %v1130, 0.0
      %v1204 = vmax.f32 %v1132, 0.0
      %v1205 = vmax.f32 %v1135, 0.0
      %v1206 = vmax.f32 %v1137, 0.0
      %v1207 = vmax.f32 %v1140, 0.0
      %v1208 = vmax.f32 %v1142, 0.0
      %v1209 = vmax.f32 %v1145, 0.0
      %v1210 = vmax.f32 %v1147, 0.0
      %v1211 = vmax.f32 %v1150, 0.0
      %v1212 = vmax.f32 %v1152, 0.0
      %v1213 = vmax.f32 %v1155, 0.0
      %v1214 = vmax.f32 %v1157, 0.0
      %v1215 = vmax.f32 %v1160, 0.0
      %v1216 = vmax.f32 %v1162, 0.0
      %v1217 = vmax.f32 %v1165, 0.0
      %v1218 = vmax.f32 %v1167, 0.0
      %v1219 = vmax.f32 %v1170, 0.0
      %v1220 = vmax.f32 %v1172, 0.0
      %v1221 = vmax.f32 %v1175, 0.0
      %v1222 = vmax.f32 %v1177, 0.0
      %v1223 = vmax.f32 %v1180, 0.0
      %v1224 = vmax.f32 %v1182, 0.0
      %v1225 = vmax.f32 %v1185, 0.0
      %v1226 = vmax.f32 %v1187, 0.0
      %v1227 = vmax.f32 %v1190, 0.0
      %v1228 = vmax.f32 %v1192, 0.0
      %v1229 = vmax.f32 %v1195, 0.0
      %v1230 = vmax.f32 %v1197, 0.0
      %v1231 = vld [vmem:[%s2 + $0x180] sm:$0xf]
      %v1232 = vld [vmem:[%s2 + $0x184] sm:$0xf]
      %v1233 = vld [vmem:[%s2 + $0x188] sm:$0xf]
      %v1234 = vld [vmem:[%s2 + $0x18c] sm:$0xf]
      %v1235 = vld [vmem:[%s2 + $0x190] sm:$0xf]
      %v1236 = vld [vmem:[%s2 + $0x194] sm:$0xf]
      %v1237 = vld [vmem:[%s2 + $0x198] sm:$0xf]
      %v1238 = vld [vmem:[%s2 + $0x19c] sm:$0xf]
      %v1239 = vld [vmem:[%s2 + $0x1a0] sm:$0xf]
      %v1240 = vld [vmem:[%s2 + $0x1a4] sm:$0xf]
      %v1241 = vld [vmem:[%s2 + $0x1a8] sm:$0xf]
      %v1242 = vld [vmem:[%s2 + $0x1ac] sm:$0xf]
      %v1243 = vld [vmem:[%s2 + $0x1b0] sm:$0xf]
      %v1244 = vld [vmem:[%s2 + $0x1b4] sm:$0xf]
      %v1245 = vld [vmem:[%s2 + $0x1b8] sm:$0xf]
      %v1246 = vld [vmem:[%s2 + $0x1bc] sm:$0xf]
      %v1247 = vld [vmem:[%s3 + $0x6] sm:$0x1]
      %v1248 = vpack.c.bf16 %v1200, %v1199
      %v1249 = vpack.c.bf16 %v1202, %v1201
      %v1250 = vpack.c.bf16 %v1204, %v1203
      %v1251 = vpack.c.bf16 %v1206, %v1205
      %v1252 = vpack.c.bf16 %v1208, %v1207
      %v1253 = vpack.c.bf16 %v1210, %v1209
      %v1254 = vpack.c.bf16 %v1212, %v1211
      %v1255 = vpack.c.bf16 %v1214, %v1213
      %v1256 = vpack.c.bf16 %v1216, %v1215
      %v1257 = vpack.c.bf16 %v1218, %v1217
      %v1258 = vpack.c.bf16 %v1220, %v1219
      %v1259 = vpack.c.bf16 %v1222, %v1221
      %v1260 = vpack.c.bf16 %v1224, %v1223
      %v1261 = vpack.c.bf16 %v1226, %v1225
      %v1262 = vpack.c.bf16 %v1228, %v1227
      %v1263 = vpack.c.bf16 %v1230, %v1229
      %v1264 = vperm.slane %v1247, 0
      %v1281 = vunpack.c.l.b16 %v1231
      %v1282 = vunpack.c.l.b16 %v1232
      %v1283 = vunpack.c.l.b16 %v1233
      %v1284 = vunpack.c.l.b16 %v1234
      %v1285 = vunpack.c.l.b16 %v1235
      %v1286 = vunpack.c.l.b16 %v1236
      %v1287 = vunpack.c.l.b16 %v1237
      %v1288 = vunpack.c.l.b16 %v1238
      %v1289 = vunpack.c.l.b16 %v1239
      %v1290 = vunpack.c.l.b16 %v1240
      %v1291 = vunpack.c.l.b16 %v1241
      %v1292 = vunpack.c.l.b16 %v1242
      %v1293 = vunpack.c.l.b16 %v1243
      %v1294 = vunpack.c.l.b16 %v1244
      %v1295 = vunpack.c.l.b16 %v1245
      %v1296 = vunpack.c.l.b16 %v1246
      %v1297 = vpack.c.b16 %v1282, %v1281
      %v1298 = vpack.c.b16 %v1284, %v1283
      %v1299 = vpack.c.b16 %v1286, %v1285
      %v1300 = vpack.c.b16 %v1288, %v1287
      %v1301 = vpack.c.b16 %v1290, %v1289
      %v1302 = vpack.c.b16 %v1292, %v1291
      %v1303 = vpack.c.b16 %v1294, %v1293
      %v1304 = vpack.c.b16 %v1296, %v1295
      %1313 = vmatpush.bf16.msra.mxu0 %v1304
      %1314 = vmatpush.bf16.msra.mxu0 %v1303
      %1315 = vmatpush.bf16.msra.mxu0 %v1302
      %1316 = vmatpush.bf16.msra.mxu0 %v1301
      %1317 = vmatpush.bf16.msra.mxu0 %v1300
      %1318 = vmatpush.bf16.msra.mxu0 %v1299
      %1319 = vmatpush.bf16.msra.mxu0 %v1298
      %1320 = vmatpush.bf16.msra.mxu0 %v1297
      %1321 = vmatmul.bf16.gmra.mxu0 %v1248
      %v1322 = vpop.f32.mrf.mxu0
      %v1323 = vadd.f32 %v1264, %v1322
      %v1324 = vpop.f32.mrf.mxu0
      %v1325 = vadd.f32 %v1264, %v1324
      %1326 = vmatmul.bf16.gmra.mxu0 %v1249
      %v1327 = vpop.f32.mrf.mxu0
      %v1328 = vadd.f32 %v1264, %v1327
      %v1329 = vpop.f32.mrf.mxu0
      %v1330 = vadd.f32 %v1264, %v1329
      %1331 = vmatmul.bf16.gmra.mxu0 %v1250
      %v1332 = vpop.f32.mrf.mxu0
      %v1333 = vadd.f32 %v1264, %v1332
      %v1334 = vpop.f32.mrf.mxu0
      %v1335 = vadd.f32 %v1264, %v1334
      %1336 = vmatmul.bf16.gmra.mxu0 %v1251
      %v1337 = vpop.f32.mrf.mxu0
      %v1338 = vadd.f32 %v1264, %v1337
      %v1339 = vpop.f32.mrf.mxu0
      %v1340 = vadd.f32 %v1264, %v1339
      %1341 = vmatmul.bf16.gmra.mxu0 %v1252
      %v1342 = vpop.f32.mrf.mxu0
      %v1343 = vadd.f32 %v1264, %v1342
      %v1344 = vpop.f32.mrf.mxu0
      %v1345 = vadd.f32 %v1264, %v1344
      %1346 = vmatmul.bf16.gmra.mxu0 %v1253
      %v1347 = vpop.f32.mrf.mxu0
      %v1348 = vadd.f32 %v1264, %v1347
      %v1349 = vpop.f32.mrf.mxu0
      %v1350 = vadd.f32 %v1264, %v1349
      %1351 = vmatmul.bf16.gmra.mxu0 %v1254
      %v1352 = vpop.f32.mrf.mxu0
      %v1353 = vadd.f32 %v1264, %v1352
      %v1354 = vpop.f32.mrf.mxu0
      %v1355 = vadd.f32 %v1264, %v1354
      %1356 = vmatmul.bf16.gmra.mxu0 %v1255
      %v1357 = vpop.f32.mrf.mxu0
      %v1358 = vadd.f32 %v1264, %v1357
      %v1359 = vpop.f32.mrf.mxu0
      %v1360 = vadd.f32 %v1264, %v1359
      %1361 = vmatmul.bf16.gmra.mxu0 %v1256
      %v1362 = vpop.f32.mrf.mxu0
      %v1363 = vadd.f32 %v1264, %v1362
      %v1364 = vpop.f32.mrf.mxu0
      %v1365 = vadd.f32 %v1264, %v1364
      %1366 = vmatmul.bf16.gmra.mxu0 %v1257
      %v1367 = vpop.f32.mrf.mxu0
      %v1368 = vadd.f32 %v1264, %v1367
      %v1369 = vpop.f32.mrf.mxu0
      %v1370 = vadd.f32 %v1264, %v1369
      %1371 = vmatmul.bf16.gmra.mxu0 %v1258
      %v1372 = vpop.f32.mrf.mxu0
      %v1373 = vadd.f32 %v1264, %v1372
      %v1374 = vpop.f32.mrf.mxu0
      %v1375 = vadd.f32 %v1264, %v1374
      %1376 = vmatmul.bf16.gmra.mxu0 %v1259
      %v1377 = vpop.f32.mrf.mxu0
      %v1378 = vadd.f32 %v1264, %v1377
      %v1379 = vpop.f32.mrf.mxu0
      %v1380 = vadd.f32 %v1264, %v1379
      %1381 = vmatmul.bf16.gmra.mxu0 %v1260
      %v1382 = vpop.f32.mrf.mxu0
      %v1383 = vadd.f32 %v1264, %v1382
      %v1384 = vpop.f32.mrf.mxu0
      %v1385 = vadd.f32 %v1264, %v1384
      %1386 = vmatmul.bf16.gmra.mxu0 %v1261
      %v1387 = vpop.f32.mrf.mxu0
      %v1388 = vadd.f32 %v1264, %v1387
      %v1389 = vpop.f32.mrf.mxu0
      %v1390 = vadd.f32 %v1264, %v1389
      %1391 = vmatmul.bf16.gmra.mxu0 %v1262
      %v1392 = vpop.f32.mrf.mxu0
      %v1393 = vadd.f32 %v1264, %v1392
      %v1394 = vpop.f32.mrf.mxu0
      %v1395 = vadd.f32 %v1264, %v1394
      %1396 = vmatmul.bf16.gmra.mxu0 %v1263
      %v1397 = vpop.f32.mrf.mxu0
      %v1398 = vadd.f32 %v1264, %v1397
      %v1399 = vpop.f32.mrf.mxu0
      %v1400 = vadd.f32 %v1264, %v1399
      %1401 = vdwg.mxu0
      %v1402 = vxor.u32 %v1323, 2147483648
      %v1403 = vxor.u32 %v1325, 2147483648
      %v1404 = vxor.u32 %v1328, 2147483648
      %v1405 = vxor.u32 %v1330, 2147483648
      %v1406 = vxor.u32 %v1333, 2147483648
      %v1407 = vxor.u32 %v1335, 2147483648
      %v1408 = vxor.u32 %v1338, 2147483648
      %v1409 = vxor.u32 %v1340, 2147483648
      %v1410 = vxor.u32 %v1343, 2147483648
      %v1411 = vxor.u32 %v1345, 2147483648
      %v1412 = vxor.u32 %v1348, 2147483648
      %v1413 = vxor.u32 %v1350, 2147483648
      %v1414 = vxor.u32 %v1353, 2147483648
      %v1415 = vxor.u32 %v1355, 2147483648
      %v1416 = vxor.u32 %v1358, 2147483648
      %v1417 = vxor.u32 %v1360, 2147483648
      %v1418 = vxor.u32 %v1363, 2147483648
      %v1419 = vxor.u32 %v1365, 2147483648
      %v1420 = vxor.u32 %v1368, 2147483648
      %v1421 = vxor.u32 %v1370, 2147483648
      %v1422 = vxor.u32 %v1373, 2147483648
      %v1423 = vxor.u32 %v1375, 2147483648
      %v1424 = vxor.u32 %v1378, 2147483648
      %v1425 = vxor.u32 %v1380, 2147483648
      %v1426 = vxor.u32 %v1383, 2147483648
      %v1427 = vxor.u32 %v1385, 2147483648
      %v1428 = vxor.u32 %v1388, 2147483648
      %v1429 = vxor.u32 %v1390, 2147483648
      %v1430 = vxor.u32 %v1393, 2147483648
      %v1431 = vxor.u32 %v1395, 2147483648
      %v1432 = vxor.u32 %v1398, 2147483648
      %v1433 = vxor.u32 %v1400, 2147483648
      %v1434 = vmul.f32 %v1402, 1.442695
      %v1435 = vpow.pop %v1434
      %v1436 = vmul.f32 %v1403, 1.442695
      %v1437 = vpow.pop %v1436
      %v1438 = vmul.f32 %v1404, 1.442695
      %v1439 = vpow.pop %v1438
      %v1440 = vmul.f32 %v1405, 1.442695
      %v1441 = vpow.pop %v1440
      %v1442 = vmul.f32 %v1406, 1.442695
      %v1443 = vpow.pop %v1442
      %v1444 = vmul.f32 %v1407, 1.442695
      %v1445 = vpow.pop %v1444
      %v1446 = vmul.f32 %v1408, 1.442695
      %v1447 = vpow.pop %v1446
      %v1448 = vmul.f32 %v1409, 1.442695
      %v1449 = vpow.pop %v1448
      %v1450 = vmul.f32 %v1410, 1.442695
      %v1451 = vpow.pop %v1450
      %v1452 = vmul.f32 %v1411, 1.442695
      %v1453 = vpow.pop %v1452
      %v1454 = vmul.f32 %v1412, 1.442695
      %v1455 = vpow.pop %v1454
      %v1456 = vmul.f32 %v1413, 1.442695
      %v1457 = vpow.pop %v1456
      %v1458 = vmul.f32 %v1414, 1.442695
      %v1459 = vpow.pop %v1458
      %v1460 = vmul.f32 %v1415, 1.442695
      %v1461 = vpow.pop %v1460
      %v1462 = vmul.f32 %v1416, 1.442695
      %v1463 = vpow.pop %v1462
      %v1464 = vmul.f32 %v1417, 1.442695
      %v1465 = vpow.pop %v1464
      %v1466 = vmul.f32 %v1418, 1.442695
      %v1467 = vpow.pop %v1466
      %v1468 = vmul.f32 %v1419, 1.442695
      %v1469 = vpow.pop %v1468
      %v1470 = vmul.f32 %v1420, 1.442695
      %v1471 = vpow.pop %v1470
      %v1472 = vmul.f32 %v1421, 1.442695
      %v1473 = vpow.pop %v1472
      %v1474 = vmul.f32 %v1422, 1.442695
      %v1475 = vpow.pop %v1474
      %v1476 = vmul.f32 %v1423, 1.442695
      %v1477 = vpow.pop %v1476
      %v1478 = vmul.f32 %v1424, 1.442695
      %v1479 = vpow.pop %v1478
      %v1480 = vmul.f32 %v1425, 1.442695
      %v1481 = vpow.pop %v1480
      %v1482 = vmul.f32 %v1426, 1.442695
      %v1483 = vpow.pop %v1482
      %v1484 = vmul.f32 %v1427, 1.442695
      %v1485 = vpow.pop %v1484
      %v1486 = vmul.f32 %v1428, 1.442695
      %v1487 = vpow.pop %v1486
      %v1488 = vmul.f32 %v1429, 1.442695
      %v1489 = vpow.pop %v1488
      %v1490 = vmul.f32 %v1430, 1.442695
      %v1491 = vpow.pop %v1490
      %v1492 = vmul.f32 %v1431, 1.442695
      %v1493 = vpow.pop %v1492
      %v1494 = vmul.f32 %v1432, 1.442695
      %v1495 = vpow.pop %v1494
      %v1496 = vmul.f32 %v1433, 1.442695
      %v1497 = vpow.pop %v1496
      %v1498 = vadd.f32 %v1435, 1.0
      %v1499 = vadd.f32 %v1437, 1.0
      %v1500 = vadd.f32 %v1439, 1.0
      %v1501 = vadd.f32 %v1441, 1.0
      %v1502 = vadd.f32 %v1443, 1.0
      %v1503 = vadd.f32 %v1445, 1.0
      %v1504 = vadd.f32 %v1447, 1.0
      %v1505 = vadd.f32 %v1449, 1.0
      %v1506 = vadd.f32 %v1451, 1.0
      %v1507 = vadd.f32 %v1453, 1.0
      %v1508 = vadd.f32 %v1455, 1.0
      %v1509 = vadd.f32 %v1457, 1.0
      %v1510 = vadd.f32 %v1459, 1.0
      %v1511 = vadd.f32 %v1461, 1.0
      %v1512 = vadd.f32 %v1463, 1.0
      %v1513 = vadd.f32 %v1465, 1.0
      %v1514 = vadd.f32 %v1467, 1.0
      %v1515 = vadd.f32 %v1469, 1.0
      %v1516 = vadd.f32 %v1471, 1.0
      %v1517 = vadd.f32 %v1473, 1.0
      %v1518 = vadd.f32 %v1475, 1.0
      %v1519 = vadd.f32 %v1477, 1.0
      %v1520 = vadd.f32 %v1479, 1.0
      %v1521 = vadd.f32 %v1481, 1.0
      %v1522 = vadd.f32 %v1483, 1.0
      %v1523 = vadd.f32 %v1485, 1.0
      %v1524 = vadd.f32 %v1487, 1.0
      %v1525 = vadd.f32 %v1489, 1.0
      %v1526 = vadd.f32 %v1491, 1.0
      %v1527 = vadd.f32 %v1493, 1.0
      %v1528 = vadd.f32 %v1495, 1.0
      %v1529 = vadd.f32 %v1497, 1.0
      %v1530 = vrcp.pop %v1498
      %v1531 = vmul.f32 %v1498, %v1530
      %v1532 = vsub.f32 1.0, %v1531
      %v1533 = vmul.f32 %v1530, %v1532
      %v1534 = vadd.f32 %v1530, %v1533
      %vm1535 = vweird.f32 %v1498
      %vm1536 = vweird.f32 %v1530
      %vm1537 = vmor %vm1535, %vm1536
      %v1538 = vsel %vm1537, %v1530, %v1534
      %v1539 = vand.u32 2147483647, %v1498
      %vm1540 = vcmp.eq.f32.partialorder %v1539, 8.507059e+37
      %v1541 = vand.u32 %v1498, 2147483648
      %v1542 = vor.u32 1.1754944e-38, %v1541
      %v1543 = vsel %vm1540, %v1542, %v1538
      %v1544 = vmul.f32 1.0, %v1543
      %v1545 = vrcp.pop %v1499
      %v1546 = vmul.f32 %v1499, %v1545
      %v1547 = vsub.f32 1.0, %v1546
      %v1548 = vmul.f32 %v1545, %v1547
      %v1549 = vadd.f32 %v1545, %v1548
      %vm1550 = vweird.f32 %v1499
      %vm1551 = vweird.f32 %v1545
      %vm1552 = vmor %vm1550, %vm1551
      %v1553 = vsel %vm1552, %v1545, %v1549
      %v1554 = vand.u32 2147483647, %v1499
      %vm1555 = vcmp.eq.f32.partialorder %v1554, 8.507059e+37
      %v1556 = vand.u32 %v1499, 2147483648
      %v1557 = vor.u32 1.1754944e-38, %v1556
      %v1558 = vsel %vm1555, %v1557, %v1553
      %v1559 = vmul.f32 1.0, %v1558
      %v1560 = vrcp.pop %v1500
      %v1561 = vmul.f32 %v1500, %v1560
      %v1562 = vsub.f32 1.0, %v1561
      %v1563 = vmul.f32 %v1560, %v1562
      %v1564 = vadd.f32 %v1560, %v1563
      %vm1565 = vweird.f32 %v1500
      %vm1566 = vweird.f32 %v1560
      %vm1567 = vmor %vm1565, %vm1566
      %v1568 = vsel %vm1567, %v1560, %v1564
      %v1569 = vand.u32 2147483647, %v1500
      %vm1570 = vcmp.eq.f32.partialorder %v1569, 8.507059e+37
      %v1571 = vand.u32 %v1500, 2147483648
      %v1572 = vor.u32 1.1754944e-38, %v1571
      %v1573 = vsel %vm1570, %v1572, %v1568
      %v1574 = vmul.f32 1.0, %v1573
      %v1575 = vrcp.pop %v1501
      %v1576 = vmul.f32 %v1501, %v1575
      %v1577 = vsub.f32 1.0, %v1576
      %v1578 = vmul.f32 %v1575, %v1577
      %v1579 = vadd.f32 %v1575, %v1578
      %vm1580 = vweird.f32 %v1501
      %vm1581 = vweird.f32 %v1575
      %vm1582 = vmor %vm1580, %vm1581
      %v1583 = vsel %vm1582, %v1575, %v1579
      %v1584 = vand.u32 2147483647, %v1501
      %vm1585 = vcmp.eq.f32.partialorder %v1584, 8.507059e+37
      %v1586 = vand.u32 %v1501, 2147483648
      %v1587 = vor.u32 1.1754944e-38, %v1586
      %v1588 = vsel %vm1585, %v1587, %v1583
      %v1589 = vmul.f32 1.0, %v1588
      %v1590 = vrcp.pop %v1502
      %v1591 = vmul.f32 %v1502, %v1590
      %v1592 = vsub.f32 1.0, %v1591
      %v1593 = vmul.f32 %v1590, %v1592
      %v1594 = vadd.f32 %v1590, %v1593
      %vm1595 = vweird.f32 %v1502
      %vm1596 = vweird.f32 %v1590
      %vm1597 = vmor %vm1595, %vm1596
      %v1598 = vsel %vm1597, %v1590, %v1594
      %v1599 = vand.u32 2147483647, %v1502
      %vm1600 = vcmp.eq.f32.partialorder %v1599, 8.507059e+37
      %v1601 = vand.u32 %v1502, 2147483648
      %v1602 = vor.u32 1.1754944e-38, %v1601
      %v1603 = vsel %vm1600, %v1602, %v1598
      %v1604 = vmul.f32 1.0, %v1603
      %v1605 = vrcp.pop %v1503
      %v1606 = vmul.f32 %v1503, %v1605
      %v1607 = vsub.f32 1.0, %v1606
      %v1608 = vmul.f32 %v1605, %v1607
      %v1609 = vadd.f32 %v1605, %v1608
      %vm1610 = vweird.f32 %v1503
      %vm1611 = vweird.f32 %v1605
      %vm1612 = vmor %vm1610, %vm1611
      %v1613 = vsel %vm1612, %v1605, %v1609
      %v1614 = vand.u32 2147483647, %v1503
      %vm1615 = vcmp.eq.f32.partialorder %v1614, 8.507059e+37
      %v1616 = vand.u32 %v1503, 2147483648
      %v1617 = vor.u32 1.1754944e-38, %v1616
      %v1618 = vsel %vm1615, %v1617, %v1613
      %v1619 = vmul.f32 1.0, %v1618
      %v1620 = vrcp.pop %v1504
      %v1621 = vmul.f32 %v1504, %v1620
      %v1622 = vsub.f32 1.0, %v1621
      %v1623 = vmul.f32 %v1620, %v1622
      %v1624 = vadd.f32 %v1620, %v1623
      %vm1625 = vweird.f32 %v1504
      %vm1626 = vweird.f32 %v1620
      %vm1627 = vmor %vm1625, %vm1626
      %v1628 = vsel %vm1627, %v1620, %v1624
      %v1629 = vand.u32 2147483647, %v1504
      %vm1630 = vcmp.eq.f32.partialorder %v1629, 8.507059e+37
      %v1631 = vand.u32 %v1504, 2147483648
      %v1632 = vor.u32 1.1754944e-38, %v1631
      %v1633 = vsel %vm1630, %v1632, %v1628
      %v1634 = vmul.f32 1.0, %v1633
      %v1635 = vrcp.pop %v1505
      %v1636 = vmul.f32 %v1505, %v1635
      %v1637 = vsub.f32 1.0, %v1636
      %v1638 = vmul.f32 %v1635, %v1637
      %v1639 = vadd.f32 %v1635, %v1638
      %vm1640 = vweird.f32 %v1505
      %vm1641 = vweird.f32 %v1635
      %vm1642 = vmor %vm1640, %vm1641
      %v1643 = vsel %vm1642, %v1635, %v1639
      %v1644 = vand.u32 2147483647, %v1505
      %vm1645 = vcmp.eq.f32.partialorder %v1644, 8.507059e+37
      %v1646 = vand.u32 %v1505, 2147483648
      %v1647 = vor.u32 1.1754944e-38, %v1646
      %v1648 = vsel %vm1645, %v1647, %v1643
      %v1649 = vmul.f32 1.0, %v1648
      %v1650 = vrcp.pop %v1506
      %v1651 = vmul.f32 %v1506, %v1650
      %v1652 = vsub.f32 1.0, %v1651
      %v1653 = vmul.f32 %v1650, %v1652
      %v1654 = vadd.f32 %v1650, %v1653
      %vm1655 = vweird.f32 %v1506
      %vm1656 = vweird.f32 %v1650
      %vm1657 = vmor %vm1655, %vm1656
      %v1658 = vsel %vm1657, %v1650, %v1654
      %v1659 = vand.u32 2147483647, %v1506
      %vm1660 = vcmp.eq.f32.partialorder %v1659, 8.507059e+37
      %v1661 = vand.u32 %v1506, 2147483648
      %v1662 = vor.u32 1.1754944e-38, %v1661
      %v1663 = vsel %vm1660, %v1662, %v1658
      %v1664 = vmul.f32 1.0, %v1663
      %v1665 = vrcp.pop %v1507
      %v1666 = vmul.f32 %v1507, %v1665
      %v1667 = vsub.f32 1.0, %v1666
      %v1668 = vmul.f32 %v1665, %v1667
      %v1669 = vadd.f32 %v1665, %v1668
      %vm1670 = vweird.f32 %v1507
      %vm1671 = vweird.f32 %v1665
      %vm1672 = vmor %vm1670, %vm1671
      %v1673 = vsel %vm1672, %v1665, %v1669
      %v1674 = vand.u32 2147483647, %v1507
      %vm1675 = vcmp.eq.f32.partialorder %v1674, 8.507059e+37
      %v1676 = vand.u32 %v1507, 2147483648
      %v1677 = vor.u32 1.1754944e-38, %v1676
      %v1678 = vsel %vm1675, %v1677, %v1673
      %v1679 = vmul.f32 1.0, %v1678
      %v1680 = vrcp.pop %v1508
      %v1681 = vmul.f32 %v1508, %v1680
      %v1682 = vsub.f32 1.0, %v1681
      %v1683 = vmul.f32 %v1680, %v1682
      %v1684 = vadd.f32 %v1680, %v1683
      %vm1685 = vweird.f32 %v1508
      %vm1686 = vweird.f32 %v1680
      %vm1687 = vmor %vm1685, %vm1686
      %v1688 = vsel %vm1687, %v1680, %v1684
      %v1689 = vand.u32 2147483647, %v1508
      %vm1690 = vcmp.eq.f32.partialorder %v1689, 8.507059e+37
      %v1691 = vand.u32 %v1508, 2147483648
      %v1692 = vor.u32 1.1754944e-38, %v1691
      %v1693 = vsel %vm1690, %v1692, %v1688
      %v1694 = vmul.f32 1.0, %v1693
      %v1695 = vrcp.pop %v1509
      %v1696 = vmul.f32 %v1509, %v1695
      %v1697 = vsub.f32 1.0, %v1696
      %v1698 = vmul.f32 %v1695, %v1697
      %v1699 = vadd.f32 %v1695, %v1698
      %vm1700 = vweird.f32 %v1509
      %vm1701 = vweird.f32 %v1695
      %vm1702 = vmor %vm1700, %vm1701
      %v1703 = vsel %vm1702, %v1695, %v1699
      %v1704 = vand.u32 2147483647, %v1509
      %vm1705 = vcmp.eq.f32.partialorder %v1704, 8.507059e+37
      %v1706 = vand.u32 %v1509, 2147483648
      %v1707 = vor.u32 1.1754944e-38, %v1706
      %v1708 = vsel %vm1705, %v1707, %v1703
      %v1709 = vmul.f32 1.0, %v1708
      %v1710 = vrcp.pop %v1510
      %v1711 = vmul.f32 %v1510, %v1710
      %v1712 = vsub.f32 1.0, %v1711
      %v1713 = vmul.f32 %v1710, %v1712
      %v1714 = vadd.f32 %v1710, %v1713
      %vm1715 = vweird.f32 %v1510
      %vm1716 = vweird.f32 %v1710
      %vm1717 = vmor %vm1715, %vm1716
      %v1718 = vsel %vm1717, %v1710, %v1714
      %v1719 = vand.u32 2147483647, %v1510
      %vm1720 = vcmp.eq.f32.partialorder %v1719, 8.507059e+37
      %v1721 = vand.u32 %v1510, 2147483648
      %v1722 = vor.u32 1.1754944e-38, %v1721
      %v1723 = vsel %vm1720, %v1722, %v1718
      %v1724 = vmul.f32 1.0, %v1723
      %v1725 = vrcp.pop %v1511
      %v1726 = vmul.f32 %v1511, %v1725
      %v1727 = vsub.f32 1.0, %v1726
      %v1728 = vmul.f32 %v1725, %v1727
      %v1729 = vadd.f32 %v1725, %v1728
      %vm1730 = vweird.f32 %v1511
      %vm1731 = vweird.f32 %v1725
      %vm1732 = vmor %vm1730, %vm1731
      %v1733 = vsel %vm1732, %v1725, %v1729
      %v1734 = vand.u32 2147483647, %v1511
      %vm1735 = vcmp.eq.f32.partialorder %v1734, 8.507059e+37
      %v1736 = vand.u32 %v1511, 2147483648
      %v1737 = vor.u32 1.1754944e-38, %v1736
      %v1738 = vsel %vm1735, %v1737, %v1733
      %v1739 = vmul.f32 1.0, %v1738
      %v1740 = vrcp.pop %v1512
      %v1741 = vmul.f32 %v1512, %v1740
      %v1742 = vsub.f32 1.0, %v1741
      %v1743 = vmul.f32 %v1740, %v1742
      %v1744 = vadd.f32 %v1740, %v1743
      %vm1745 = vweird.f32 %v1512
      %vm1746 = vweird.f32 %v1740
      %vm1747 = vmor %vm1745, %vm1746
      %v1748 = vsel %vm1747, %v1740, %v1744
      %v1749 = vand.u32 2147483647, %v1512
      %vm1750 = vcmp.eq.f32.partialorder %v1749, 8.507059e+37
      %v1751 = vand.u32 %v1512, 2147483648
      %v1752 = vor.u32 1.1754944e-38, %v1751
      %v1753 = vsel %vm1750, %v1752, %v1748
      %v1754 = vmul.f32 1.0, %v1753
      %v1755 = vrcp.pop %v1513
      %v1756 = vmul.f32 %v1513, %v1755
      %v1757 = vsub.f32 1.0, %v1756
      %v1758 = vmul.f32 %v1755, %v1757
      %v1759 = vadd.f32 %v1755, %v1758
      %vm1760 = vweird.f32 %v1513
      %vm1761 = vweird.f32 %v1755
      %vm1762 = vmor %vm1760, %vm1761
      %v1763 = vsel %vm1762, %v1755, %v1759
      %v1764 = vand.u32 2147483647, %v1513
      %vm1765 = vcmp.eq.f32.partialorder %v1764, 8.507059e+37
      %v1766 = vand.u32 %v1513, 2147483648
      %v1767 = vor.u32 1.1754944e-38, %v1766
      %v1768 = vsel %vm1765, %v1767, %v1763
      %v1769 = vmul.f32 1.0, %v1768
      %v1770 = vrcp.pop %v1514
      %v1771 = vmul.f32 %v1514, %v1770
      %v1772 = vsub.f32 1.0, %v1771
      %v1773 = vmul.f32 %v1770, %v1772
      %v1774 = vadd.f32 %v1770, %v1773
      %vm1775 = vweird.f32 %v1514
      %vm1776 = vweird.f32 %v1770
      %vm1777 = vmor %vm1775, %vm1776
      %v1778 = vsel %vm1777, %v1770, %v1774
      %v1779 = vand.u32 2147483647, %v1514
      %vm1780 = vcmp.eq.f32.partialorder %v1779, 8.507059e+37
      %v1781 = vand.u32 %v1514, 2147483648
      %v1782 = vor.u32 1.1754944e-38, %v1781
      %v1783 = vsel %vm1780, %v1782, %v1778
      %v1784 = vmul.f32 1.0, %v1783
      %v1785 = vrcp.pop %v1515
      %v1786 = vmul.f32 %v1515, %v1785
      %v1787 = vsub.f32 1.0, %v1786
      %v1788 = vmul.f32 %v1785, %v1787
      %v1789 = vadd.f32 %v1785, %v1788
      %vm1790 = vweird.f32 %v1515
      %vm1791 = vweird.f32 %v1785
      %vm1792 = vmor %vm1790, %vm1791
      %v1793 = vsel %vm1792, %v1785, %v1789
      %v1794 = vand.u32 2147483647, %v1515
      %vm1795 = vcmp.eq.f32.partialorder %v1794, 8.507059e+37
      %v1796 = vand.u32 %v1515, 2147483648
      %v1797 = vor.u32 1.1754944e-38, %v1796
      %v1798 = vsel %vm1795, %v1797, %v1793
      %v1799 = vmul.f32 1.0, %v1798
      %v1800 = vrcp.pop %v1516
      %v1801 = vmul.f32 %v1516, %v1800
      %v1802 = vsub.f32 1.0, %v1801
      %v1803 = vmul.f32 %v1800, %v1802
      %v1804 = vadd.f32 %v1800, %v1803
      %vm1805 = vweird.f32 %v1516
      %vm1806 = vweird.f32 %v1800
      %vm1807 = vmor %vm1805, %vm1806
      %v1808 = vsel %vm1807, %v1800, %v1804
      %v1809 = vand.u32 2147483647, %v1516
      %vm1810 = vcmp.eq.f32.partialorder %v1809, 8.507059e+37
      %v1811 = vand.u32 %v1516, 2147483648
      %v1812 = vor.u32 1.1754944e-38, %v1811
      %v1813 = vsel %vm1810, %v1812, %v1808
      %v1814 = vmul.f32 1.0, %v1813
      %v1815 = vrcp.pop %v1517
      %v1816 = vmul.f32 %v1517, %v1815
      %v1817 = vsub.f32 1.0, %v1816
      %v1818 = vmul.f32 %v1815, %v1817
      %v1819 = vadd.f32 %v1815, %v1818
      %vm1820 = vweird.f32 %v1517
      %vm1821 = vweird.f32 %v1815
      %vm1822 = vmor %vm1820, %vm1821
      %v1823 = vsel %vm1822, %v1815, %v1819
      %v1824 = vand.u32 2147483647, %v1517
      %vm1825 = vcmp.eq.f32.partialorder %v1824, 8.507059e+37
      %v1826 = vand.u32 %v1517, 2147483648
      %v1827 = vor.u32 1.1754944e-38, %v1826
      %v1828 = vsel %vm1825, %v1827, %v1823
      %v1829 = vmul.f32 1.0, %v1828
      %v1830 = vrcp.pop %v1518
      %v1831 = vmul.f32 %v1518, %v1830
      %v1832 = vsub.f32 1.0, %v1831
      %v1833 = vmul.f32 %v1830, %v1832
      %v1834 = vadd.f32 %v1830, %v1833
      %vm1835 = vweird.f32 %v1518
      %vm1836 = vweird.f32 %v1830
      %vm1837 = vmor %vm1835, %vm1836
      %v1838 = vsel %vm1837, %v1830, %v1834
      %v1839 = vand.u32 2147483647, %v1518
      %vm1840 = vcmp.eq.f32.partialorder %v1839, 8.507059e+37
      %v1841 = vand.u32 %v1518, 2147483648
      %v1842 = vor.u32 1.1754944e-38, %v1841
      %v1843 = vsel %vm1840, %v1842, %v1838
      %v1844 = vmul.f32 1.0, %v1843
      %v1845 = vrcp.pop %v1519
      %v1846 = vmul.f32 %v1519, %v1845
      %v1847 = vsub.f32 1.0, %v1846
      %v1848 = vmul.f32 %v1845, %v1847
      %v1849 = vadd.f32 %v1845, %v1848
      %vm1850 = vweird.f32 %v1519
      %vm1851 = vweird.f32 %v1845
      %vm1852 = vmor %vm1850, %vm1851
      %v1853 = vsel %vm1852, %v1845, %v1849
      %v1854 = vand.u32 2147483647, %v1519
      %vm1855 = vcmp.eq.f32.partialorder %v1854, 8.507059e+37
      %v1856 = vand.u32 %v1519, 2147483648
      %v1857 = vor.u32 1.1754944e-38, %v1856
      %v1858 = vsel %vm1855, %v1857, %v1853
      %v1859 = vmul.f32 1.0, %v1858
      %v1860 = vrcp.pop %v1520
      %v1861 = vmul.f32 %v1520, %v1860
      %v1862 = vsub.f32 1.0, %v1861
      %v1863 = vmul.f32 %v1860, %v1862
      %v1864 = vadd.f32 %v1860, %v1863
      %vm1865 = vweird.f32 %v1520
      %vm1866 = vweird.f32 %v1860
      %vm1867 = vmor %vm1865, %vm1866
      %v1868 = vsel %vm1867, %v1860, %v1864
      %v1869 = vand.u32 2147483647, %v1520
      %vm1870 = vcmp.eq.f32.partialorder %v1869, 8.507059e+37
      %v1871 = vand.u32 %v1520, 2147483648
      %v1872 = vor.u32 1.1754944e-38, %v1871
      %v1873 = vsel %vm1870, %v1872, %v1868
      %v1874 = vmul.f32 1.0, %v1873
      %v1875 = vrcp.pop %v1521
      %v1876 = vmul.f32 %v1521, %v1875
      %v1877 = vsub.f32 1.0, %v1876
      %v1878 = vmul.f32 %v1875, %v1877
      %v1879 = vadd.f32 %v1875, %v1878
      %vm1880 = vweird.f32 %v1521
      %vm1881 = vweird.f32 %v1875
      %vm1882 = vmor %vm1880, %vm1881
      %v1883 = vsel %vm1882, %v1875, %v1879
      %v1884 = vand.u32 2147483647, %v1521
      %vm1885 = vcmp.eq.f32.partialorder %v1884, 8.507059e+37
      %v1886 = vand.u32 %v1521, 2147483648
      %v1887 = vor.u32 1.1754944e-38, %v1886
      %v1888 = vsel %vm1885, %v1887, %v1883
      %v1889 = vmul.f32 1.0, %v1888
      %v1890 = vrcp.pop %v1522
      %v1891 = vmul.f32 %v1522, %v1890
      %v1892 = vsub.f32 1.0, %v1891
      %v1893 = vmul.f32 %v1890, %v1892
      %v1894 = vadd.f32 %v1890, %v1893
      %vm1895 = vweird.f32 %v1522
      %vm1896 = vweird.f32 %v1890
      %vm1897 = vmor %vm1895, %vm1896
      %v1898 = vsel %vm1897, %v1890, %v1894
      %v1899 = vand.u32 2147483647, %v1522
      %vm1900 = vcmp.eq.f32.partialorder %v1899, 8.507059e+37
      %v1901 = vand.u32 %v1522, 2147483648
      %v1902 = vor.u32 1.1754944e-38, %v1901
      %v1903 = vsel %vm1900, %v1902, %v1898
      %v1904 = vmul.f32 1.0, %v1903
      %v1905 = vrcp.pop %v1523
      %v1906 = vmul.f32 %v1523, %v1905
      %v1907 = vsub.f32 1.0, %v1906
      %v1908 = vmul.f32 %v1905, %v1907
      %v1909 = vadd.f32 %v1905, %v1908
      %vm1910 = vweird.f32 %v1523
      %vm1911 = vweird.f32 %v1905
      %vm1912 = vmor %vm1910, %vm1911
      %v1913 = vsel %vm1912, %v1905, %v1909
      %v1914 = vand.u32 2147483647, %v1523
      %vm1915 = vcmp.eq.f32.partialorder %v1914, 8.507059e+37
      %v1916 = vand.u32 %v1523, 2147483648
      %v1917 = vor.u32 1.1754944e-38, %v1916
      %v1918 = vsel %vm1915, %v1917, %v1913
      %v1919 = vmul.f32 1.0, %v1918
      %v1920 = vrcp.pop %v1524
      %v1921 = vmul.f32 %v1524, %v1920
      %v1922 = vsub.f32 1.0, %v1921
      %v1923 = vmul.f32 %v1920, %v1922
      %v1924 = vadd.f32 %v1920, %v1923
      %vm1925 = vweird.f32 %v1524
      %vm1926 = vweird.f32 %v1920
      %vm1927 = vmor %vm1925, %vm1926
      %v1928 = vsel %vm1927, %v1920, %v1924
      %v1929 = vand.u32 2147483647, %v1524
      %vm1930 = vcmp.eq.f32.partialorder %v1929, 8.507059e+37
      %v1931 = vand.u32 %v1524, 2147483648
      %v1932 = vor.u32 1.1754944e-38, %v1931
      %v1933 = vsel %vm1930, %v1932, %v1928
      %v1934 = vmul.f32 1.0, %v1933
      %v1935 = vrcp.pop %v1525
      %v1936 = vmul.f32 %v1525, %v1935
      %v1937 = vsub.f32 1.0, %v1936
      %v1938 = vmul.f32 %v1935, %v1937
      %v1939 = vadd.f32 %v1935, %v1938
      %vm1940 = vweird.f32 %v1525
      %vm1941 = vweird.f32 %v1935
      %vm1942 = vmor %vm1940, %vm1941
      %v1943 = vsel %vm1942, %v1935, %v1939
      %v1944 = vand.u32 2147483647, %v1525
      %vm1945 = vcmp.eq.f32.partialorder %v1944, 8.507059e+37
      %v1946 = vand.u32 %v1525, 2147483648
      %v1947 = vor.u32 1.1754944e-38, %v1946
      %v1948 = vsel %vm1945, %v1947, %v1943
      %v1949 = vmul.f32 1.0, %v1948
      %v1950 = vrcp.pop %v1526
      %v1951 = vmul.f32 %v1526, %v1950
      %v1952 = vsub.f32 1.0, %v1951
      %v1953 = vmul.f32 %v1950, %v1952
      %v1954 = vadd.f32 %v1950, %v1953
      %vm1955 = vweird.f32 %v1526
      %vm1956 = vweird.f32 %v1950
      %vm1957 = vmor %vm1955, %vm1956
      %v1958 = vsel %vm1957, %v1950, %v1954
      %v1959 = vand.u32 2147483647, %v1526
      %vm1960 = vcmp.eq.f32.partialorder %v1959, 8.507059e+37
      %v1961 = vand.u32 %v1526, 2147483648
      %v1962 = vor.u32 1.1754944e-38, %v1961
      %v1963 = vsel %vm1960, %v1962, %v1958
      %v1964 = vmul.f32 1.0, %v1963
      %v1965 = vrcp.pop %v1527
      %v1966 = vmul.f32 %v1527, %v1965
      %v1967 = vsub.f32 1.0, %v1966
      %v1968 = vmul.f32 %v1965, %v1967
      %v1969 = vadd.f32 %v1965, %v1968
      %vm1970 = vweird.f32 %v1527
      %vm1971 = vweird.f32 %v1965
      %vm1972 = vmor %vm1970, %vm1971
      %v1973 = vsel %vm1972, %v1965, %v1969
      %v1974 = vand.u32 2147483647, %v1527
      %vm1975 = vcmp.eq.f32.partialorder %v1974, 8.507059e+37
      %v1976 = vand.u32 %v1527, 2147483648
      %v1977 = vor.u32 1.1754944e-38, %v1976
      %v1978 = vsel %vm1975, %v1977, %v1973
      %v1979 = vmul.f32 1.0, %v1978
      %v1980 = vrcp.pop %v1528
      %v1981 = vmul.f32 %v1528, %v1980
      %v1982 = vsub.f32 1.0, %v1981
      %v1983 = vmul.f32 %v1980, %v1982
      %v1984 = vadd.f32 %v1980, %v1983
      %vm1985 = vweird.f32 %v1528
      %vm1986 = vweird.f32 %v1980
      %vm1987 = vmor %vm1985, %vm1986
      %v1988 = vsel %vm1987, %v1980, %v1984
      %v1989 = vand.u32 2147483647, %v1528
      %vm1990 = vcmp.eq.f32.partialorder %v1989, 8.507059e+37
      %v1991 = vand.u32 %v1528, 2147483648
      %v1992 = vor.u32 1.1754944e-38, %v1991
      %v1993 = vsel %vm1990, %v1992, %v1988
      %v1994 = vmul.f32 1.0, %v1993
      %v1995 = vrcp.pop %v1529
      %v1996 = vmul.f32 %v1529, %v1995
      %v1997 = vsub.f32 1.0, %v1996
      %v1998 = vmul.f32 %v1995, %v1997
      %v1999 = vadd.f32 %v1995, %v1998
      %vm2000 = vweird.f32 %v1529
      %vm2001 = vweird.f32 %v1995
      %vm2002 = vmor %vm2000, %vm2001
      %v2003 = vsel %vm2002, %v1995, %v1999
      %v2004 = vand.u32 2147483647, %v1529
      %vm2005 = vcmp.eq.f32.partialorder %v2004, 8.507059e+37
      %v2006 = vand.u32 %v1529, 2147483648
      %v2007 = vor.u32 1.1754944e-38, %v2006
      %v2008 = vsel %vm2005, %v2007, %v2003
      %v2009 = vmul.f32 1.0, %v2008
      %2010 = vst [vmem:[%s262] sm:$0xff] %v1544
      %2011 = vst [vmem:[%s262 + $0x8] sm:$0xff] %v1559
      %2012 = vst [vmem:[%s262 + $0x10] sm:$0xff] %v1574
      %2013 = vst [vmem:[%s262 + $0x18] sm:$0xff] %v1589
      %2014 = vst [vmem:[%s262 + $0x20] sm:$0xff] %v1604
      %2015 = vst [vmem:[%s262 + $0x28] sm:$0xff] %v1619
      %2016 = vst [vmem:[%s262 + $0x30] sm:$0xff] %v1634
      %2017 = vst [vmem:[%s262 + $0x38] sm:$0xff] %v1649
      %2018 = vst [vmem:[%s262 + $0x40] sm:$0xff] %v1664
      %2019 = vst [vmem:[%s262 + $0x48] sm:$0xff] %v1679
      %2020 = vst [vmem:[%s262 + $0x50] sm:$0xff] %v1694
      %2021 = vst [vmem:[%s262 + $0x58] sm:$0xff] %v1709
      %2022 = vst [vmem:[%s262 + $0x60] sm:$0xff] %v1724
      %2023 = vst [vmem:[%s262 + $0x68] sm:$0xff] %v1739
      %2024 = vst [vmem:[%s262 + $0x70] sm:$0xff] %v1754
      %2025 = vst [vmem:[%s262 + $0x78] sm:$0xff] %v1769
      %2026 = vst [vmem:[%s262 + $0x80] sm:$0xff] %v1784
      %2027 = vst [vmem:[%s262 + $0x88] sm:$0xff] %v1799
      %2028 = vst [vmem:[%s262 + $0x90] sm:$0xff] %v1814
      %2029 = vst [vmem:[%s262 + $0x98] sm:$0xff] %v1829
      %2030 = vst [vmem:[%s262 + $0xa0] sm:$0xff] %v1844
      %2031 = vst [vmem:[%s262 + $0xa8] sm:$0xff] %v1859
      %2032 = vst [vmem:[%s262 + $0xb0] sm:$0xff] %v1874
      %2033 = vst [vmem:[%s262 + $0xb8] sm:$0xff] %v1889
      %2034 = vst [vmem:[%s262 + $0xc0] sm:$0xff] %v1904
      %2035 = vst [vmem:[%s262 + $0xc8] sm:$0xff] %v1919
      %2036 = vst [vmem:[%s262 + $0xd0] sm:$0xff] %v1934
      %2037 = vst [vmem:[%s262 + $0xd8] sm:$0xff] %v1949
      %2038 = vst [vmem:[%s262 + $0xe0] sm:$0xff] %v1964
      %2039 = vst [vmem:[%s262 + $0xe8] sm:$0xff] %v1979
      %2040 = vst [vmem:[%s262 + $0xf0] sm:$0xff] %v1994
      %2041 = vst [vmem:[%s262 + $0xf8] sm:$0xff] %v2009
      %s2042 = smul.u32 8, %s17
      %p2043 = scmp.lt.s32.totalorder %s2042, 15
      %s2044 = scalar_select %p2043, %s2042, 15
      %s2045 = smul.addr %s2044, 8
      %s2046 = scalar_lea.vmem %s4, %s2045
      %s2047 = smul.u32 32, %s17
      %p2048 = scmp.lt.s32.totalorder %s2047, 63
      %s2049 = scalar_select %p2048, %s2047, 63
      %s2050 = smul.addr %s2049, 8
      %s2051 = scalar_lea.vmem %s5, %s2050
      // Predicated region
      $region37: #{forward.1} parent=35 // pred_check
        %p2052 = pneg %p129
      $region38: #{forward.1} parent=35 // pred_check_branch
        %2054 = sbr.rel (%p2052) target = $region40
      $region39: #{forward.1} parent=35 // pred_region
        %s2055 = smul.u32 8, %s17
      $region40: #{forward.1} parent=35 // pred_fallthru
        _
      // Predicated region
      $region41: #{forward.1} parent=35 // pred_check
        %p2056 = pneg %p155
      $region42: #{forward.1} parent=35 // pred_check_branch
        %2058 = sbr.rel (%p2056) target = $region44
      $region43: #{forward.1} parent=35 // pred_region
        %s2059 = smul.u32 32, %s17
      $region44: #{forward.1} parent=35 // pred_fallthru
        _
    $region36: #{forward.1} parent=5 // pred_fallthru
      _
    %p2060 = scmp.le.s32.totalorder 2, %s12
    // Predicated region
    $region45: #{forward.1} parent=5 // pred_check
      %p2061 = pneg %p2060
    $region46: #{forward.1} parent=5 // pred_check_branch
      %2063 = sbr.rel (%p2061) target = $region48
    $region47: #{forward.1} parent=5 // pred_region
      %s2064 = ssub.s32 %s12, 2
      // Predicated region
      $region49: #{forward.1} parent=47 // pred_check
        %p2065 = pneg %p135
      $region50: #{forward.1} parent=47 // pred_check_branch
        %2067 = sbr.rel (%p2065) target = $region52
      $region51: #{forward.1} parent=47 // pred_region
        %s2068 = smul.u32 8, %s18
        %p2069 = scmp.lt.s32.totalorder %s2068, 15
        %s2070 = scalar_select %p2069, %s2068, 15
        %s2071 = smul.addr %s2070, 8
        %s2072 = scalar_lea.vmem %s4, %s2071
      $region52: #{forward.1} parent=47 // pred_fallthru
        _
      // Predicated region
      $region53: #{forward.1} parent=47 // pred_check
        %p2073 = pneg %p161
      $region54: #{forward.1} parent=47 // pred_check_branch
        %2075 = sbr.rel (%p2073) target = $region56
      $region55: #{forward.1} parent=47 // pred_region
        %s2076 = smul.u32 32, %s18
        %p2077 = scmp.lt.s32.totalorder %s2076, 63
        %s2078 = scalar_select %p2077, %s2076, 63
        %s2079 = smul.addr %s2078, 8
        %s2080 = scalar_lea.vmem %s5, %s2079
      $region56: #{forward.1} parent=47 // pred_fallthru
        _
    $region48: #{forward.1} parent=5 // pred_fallthru
      _
  $region6: #{forward.1} parent=0 // loop_footer
    %s16 = sadd.s32 1, %s12
  $region7: #{forward.1} parent=0 // loop_footer_branch
    %11 = sbr.rel target = $region3
  $region8: #{forward.1} parent=0 // loop_exit
    _

</llo_original>
